<compile_context>
chip_gen: v5e
topology: v5e:2x2
jax: 0.10.0
libtpu: 0.0.40
codegen_flags: <defaults>
</compile_context>

<pallas_src>
import jax
import jax.numpy as jnp
import numpy as np
from jax.experimental import pallas as pl
from jax.experimental.pallas import tpu as pltpu

# --- model config (matches NeRFModule(D, W, input_ch, input_ch_d)) ---
D = 8            # layers in trunk
W = 32           # channels per layer (256 in the paper; 32 for a small test)
INPUT_CH = 16    # positional-encoding channels for (x, y, z)
INPUT_CH_D = 8   # positional-encoding channels for view direction d
SKIPS = (4,)     # skip-concat applied after trunk layer 4
OUT_CH = 4       # [r, g, b, density]
SKIP_LAYER = SKIPS[0] + 1   # trunk layer that consumes the [input_x, h] concat

# --- bias-slab row offsets (all multiples of 8 -> sublane-aligned in-kernel slices)
B_OFF_TRUNK = tuple(i * W for i in range(D))    # 0, 32, ..., 224
B_OFF_FEAT = D * W                              # 256
B_OFF_DENS = B_OFF_FEAT + W                     # 288
B_OFF_DIR = B_OFF_DENS + 8                      # 296
B_OFF_COL = B_OFF_DIR + W // 2                  # 312
NB = ((B_OFF_COL + 3 + 7) // 8) * 8             # 320


def nerf_kernel(x_ref, w0_ref, wt_ref, w5a_ref, w5b_ref, w_df_ref,
                wd_feat_ref, wd_dir_ref, wc_ref, b_ref, out_ref):
    xT = x_ref[...]                               # [INPUT_CH + INPUT_CH_D, tm]
    input_x = xT[:INPUT_CH, :]                    # [16, tm]
    input_d = xT[INPUT_CH:, :]                    # [8,  tm]

    def bias(off, n):
        return b_ref[off:off + n, :]              # [n, 1], lane-broadcast on add

    def mm(w, h):
        return jnp.dot(w, h, preferred_element_type=jnp.float32)

    # ---- trunk: D layers, skip connection handled by weight splitting ----
    h = jnp.maximum(mm(w0_ref[...], input_x) + bias(B_OFF_TRUNK[0], W), 0.0)
    t = 0
    for i in range(1, D):
        if i == SKIP_LAYER:
            # layer consuming cat([input_x, h]) -> two matmuls, no concat
            z = (mm(w5a_ref[...], input_x) + mm(w5b_ref[...], h)
                 + bias(B_OFF_TRUNK[i], W))
        else:
            z = mm(wt_ref[t], h) + bias(B_OFF_TRUNK[i], W)
            t += 1
        h = jnp.maximum(z, 0.0)

    # ---- fused feature + density head: one [W+1, W] matmul ----
    df = mm(w_df_ref[...], h)                     # [W + 1, tm]
    feature = df[:W, :] + bias(B_OFF_FEAT, W)     # [32, tm]
    density = df[W:W + 1, :] + bias(B_OFF_DENS, 1)   # [1, tm]

    # ---- direction head (split weight, no concat) ----
    hd = (mm(wd_feat_ref[...], feature) + mm(wd_dir_ref[...], input_d)
          + bias(B_OFF_DIR, W // 2))
    hd = jnp.maximum(hd, 0.0)                     # [16, tm]

    rgb = mm(wc_ref[...], hd) + bias(B_OFF_COL, 3)   # [3, tm]

    # ---- lane-dense stores: rows 0:3 = rgb, row 3 = density ----
    out_ref[0:3, :] = rgb.astype(out_ref.dtype)
    out_ref[3:4, :] = density.astype(out_ref.dtype)


def nerf_forward(x, packed, *, tm=512):
    """x: [N, INPUT_CH + INPUT_CH_D] float32, N divisible by tm. Returns [N, OUT_CH]."""
    N, C = x.shape
    assert C == INPUT_CH + INPUT_CH_D
    assert tm % 128 == 0 and N % tm == 0

    xT = x.T                                      # layout plumbing outside the kernel
    flat_params = list(packed)

    in_specs = [pl.BlockSpec((C, tm), lambda i: (0, i))]
    for p in flat_params:
        # small, fully-resident parameters; constant block index -> fetched once
        in_specs.append(pl.BlockSpec(p.shape, lambda i, nd=p.ndim: (0,) * nd))
    out_spec = pl.BlockSpec((OUT_CH, tm), lambda i: (0, i))

    outT = pl.pallas_call(
        nerf_kernel,
        out_shape=jax.ShapeDtypeStruct((OUT_CH, N), jnp.float32),
        grid_spec=pltpu.PrefetchScalarGridSpec(
            num_scalar_prefetch=0,
            grid=(N // tm,),
            in_specs=in_specs,
            out_specs=out_spec,
        ),
        compiler_params=pltpu.CompilerParams(
            dimension_semantics=("parallel",)),
    )(xT, *flat_params)
    return outT.T


# --------------------- deterministic parameter init (PyTorch layout) ---------------------
def _init_linear(key, fan_in, fan_out):
    kw, kb = jax.random.split(key)
    bound = 1.0 / float(np.sqrt(fan_in))
    w = jax.random.uniform(kw, (fan_out, fan_in), jnp.float32, -bound, bound)
    b = jax.random.uniform(kb, (fan_out,), jnp.float32, -bound, bound)
    return w, b


def make_raw_params(key):
    """Parameters in PyTorch layout: weight [out, in], bias [out]."""
    keys = jax.random.split(key, D + 4)
    wx, bx = [], []
    for j in range(D):
        if j == 0:
            fan_in = INPUT_CH
        elif j == SKIP_LAYER:
            fan_in = W + INPUT_CH
        else:
            fan_in = W
        w, b = _init_linear(keys[j], fan_in, W)
        wx.append(w)
        bx.append(b)
    w_dens, b_dens = _init_linear(keys[D + 0], W, 1)
    w_feat, b_feat = _init_linear(keys[D + 1], W, W)
    w_d, b_d = _init_linear(keys[D + 2], INPUT_CH_D + W, W // 2)
    w_c, b_c = _init_linear(keys[D + 3], W // 2, 3)
    return dict(wx=wx, bx=bx, w_dens=w_dens, b_dens=b_dens,
                w_feat=w_feat, b_feat=b_feat, w_d=w_d, b_d=b_d,
                w_c=w_c, b_c=b_c)


def pack_params(raw):
    """Repack raw (PyTorch-layout) params into the kernel's 9 parameter inputs."""
    wx, bx = raw["wx"], raw["bx"]
    w0 = wx[0]                                                        # [W, 16]
    w_trunk = jnp.stack([wx[i] for i in range(1, D) if i != SKIP_LAYER])  # [6, W, W]
    w5a = wx[SKIP_LAYER][:, :INPUT_CH]                                # [W, 16]
    w5b = wx[SKIP_LAYER][:, INPUT_CH:]                                # [W, W]
    w_df = jnp.concatenate([raw["w_feat"], raw["w_dens"]], axis=0)    # [W + 1, W]
    wd_feat = raw["w_d"][:, :W]                                       # [W//2, W]
    wd_dir = raw["w_d"][:, W:]                                        # [W//2, 8]
    wc = raw["w_c"]                                                   # [3, W//2]

    b = jnp.zeros((NB, 1), jnp.float32)
    for i in range(D):
        b = b.at[B_OFF_TRUNK[i]:B_OFF_TRUNK[i] + W, 0].set(bx[i])
    b = b.at[B_OFF_FEAT:B_OFF_FEAT + W, 0].set(raw["b_feat"])
    b = b.at[B_OFF_DENS:B_OFF_DENS + 1, 0].set(raw["b_dens"])
    b = b.at[B_OFF_DIR:B_OFF_DIR + W // 2, 0].set(raw["b_d"])
    b = b.at[B_OFF_COL:B_OFF_COL + 3, 0].set(raw["b_c"])
    return (w0, w_trunk, w5a, w5b, w_df, wd_feat, wd_dir, wc, b)


# --------------------- pure-JAX reference (for sanity check) ---------------------
def nerf_reference(x, raw):
    wx, bx = raw["wx"], raw["bx"]
    input_x = x[:, :INPUT_CH]
    input_d = x[:, INPUT_CH:]
    out = input_x
    for i in range(D):
        out = jnp.maximum(out @ wx[i].T + bx[i], 0.0)
        if i in SKIPS:
            out = jnp.concatenate([input_x, out], axis=-1)
    density = out @ raw["w_dens"].T + raw["b_dens"]
    feature = out @ raw["w_feat"].T + raw["b_feat"]
    h = jnp.concatenate([feature, input_d], axis=-1) @ raw["w_d"].T + raw["b_d"]
    h = jnp.maximum(h, 0.0)
    rgb = h @ raw["w_c"].T + raw["b_c"]
    return jnp.concatenate([rgb, density], axis=-1)


if __name__ == "__main__":
    key = jax.random.PRNGKey(0)
    k_x, k_p = jax.random.split(key)

    N = 1024   # 2 grid tiles at tm=512 -> fills the MXU lanes and both v7x cores
    x = jax.random.normal(k_x, (N, INPUT_CH + INPUT_CH_D), jnp.float32)
    raw = make_raw_params(k_p)
    packed = pack_params(raw)

    out = nerf_forward(x, packed, tm=512)
    out = jax.block_until_ready(out)

    ref = nerf_reference(x, raw)
    assert out.shape == (N, OUT_CH)
    err = float(jnp.max(jnp.abs(out - ref)))
    assert err < 1e-3, f"max abs error {err}"

    print("KERNEL_OK")
</pallas_src>

<mosaic_0001>
module attributes {stable_mosaic.version = 11 : i64} {
  func.func @nerf_kernel(%arg0: i32, %arg1: memref<24x512xf32, #tpu.memory_space<vmem>>, %arg2: memref<32x16xf32, #tpu.memory_space<vmem>>, %arg3: memref<6x32x32xf32, #tpu.memory_space<vmem>>, %arg4: memref<32x16xf32, #tpu.memory_space<vmem>>, %arg5: memref<32x32xf32, #tpu.memory_space<vmem>>, %arg6: memref<33x32xf32, #tpu.memory_space<vmem>>, %arg7: memref<16x32xf32, #tpu.memory_space<vmem>>, %arg8: memref<16x8xf32, #tpu.memory_space<vmem>>, %arg9: memref<3x16xf32, #tpu.memory_space<vmem>>, %arg10: memref<320x1xf32, #tpu.memory_space<vmem>>, %arg11: memref<4x512xf32, #tpu.memory_space<vmem>>) attributes {dimension_semantics = [#tpu.dimension_semantics<parallel>], iteration_bounds = array<i64: 2>, scalar_prefetch = 0 : i64, scratch_operands = 0 : i64, tpu.core_type = #tpu.core_type<tc>, window_params = [{transform_indices = @transform_0, window_bounds = array<i64: 24, 512>}, {pipeline_mode = #tpu.pipeline_mode<synchronous>, transform_indices = @transform_1, window_bounds = array<i64: 32, 16>}, {pipeline_mode = #tpu.pipeline_mode<synchronous>, transform_indices = @transform_2, window_bounds = array<i64: 6, 32, 32>}, {pipeline_mode = #tpu.pipeline_mode<synchronous>, transform_indices = @transform_3, window_bounds = array<i64: 32, 16>}, {pipeline_mode = #tpu.pipeline_mode<synchronous>, transform_indices = @transform_4, window_bounds = array<i64: 32, 32>}, {pipeline_mode = #tpu.pipeline_mode<synchronous>, transform_indices = @transform_5, window_bounds = array<i64: 33, 32>}, {pipeline_mode = #tpu.pipeline_mode<synchronous>, transform_indices = @transform_6, window_bounds = array<i64: 16, 32>}, {pipeline_mode = #tpu.pipeline_mode<synchronous>, transform_indices = @transform_7, window_bounds = array<i64: 16, 8>}, {pipeline_mode = #tpu.pipeline_mode<synchronous>, transform_indices = @transform_8, window_bounds = array<i64: 3, 16>}, {pipeline_mode = #tpu.pipeline_mode<synchronous>, transform_indices = @transform_9, window_bounds = array<i64: 320, 1>}, {transform_indices = @transform_10, window_bounds = array<i64: 4, 512>}]} {
    %c0 = arith.constant 0 : index
    %c0_0 = arith.constant 0 : index
    %0 = vector.load %arg1[%c0, %c0_0] : memref<24x512xf32, #tpu.memory_space<vmem>>, vector<24x512xf32>
    %1 = vector.extract_strided_slice %0 {offsets = [0, 0], sizes = [16, 512], strides = [1, 1]} : vector<24x512xf32> to vector<16x512xf32>
    %2 = vector.extract_strided_slice %0 {offsets = [16, 0], sizes = [8, 512], strides = [1, 1]} : vector<24x512xf32> to vector<8x512xf32>
    %c0_1 = arith.constant 0 : index
    %c0_2 = arith.constant 0 : index
    %3 = vector.load %arg2[%c0_1, %c0_2] : memref<32x16xf32, #tpu.memory_space<vmem>>, vector<32x16xf32>
    %cst = arith.constant dense<0.000000e+00> : vector<32x512xf32>
    %4 = tpu.matmul %3, %1, %cst {dimension_numbers = #tpu.dot_dimension_numbers<[1], [0], [0], [1], [0, 0, 1, 1], [], []>} : vector<32x16xf32>, vector<16x512xf32>, vector<32x512xf32> -> vector<32x512xf32>
    %c0_3 = arith.constant 0 : index
    %c0_4 = arith.constant 0 : index
    %5 = vector.load %arg10[%c0_3, %c0_4] : memref<320x1xf32, #tpu.memory_space<vmem>>, vector<32x1xf32>
    %6 = vector.broadcast %5 : vector<32x1xf32> to vector<32x512xf32>
    %7 = arith.addf %4, %6 : vector<32x512xf32>
    %cst_5 = arith.constant 0.000000e+00 : f32
    %8 = vector.broadcast %cst_5 : f32 to vector<32x512xf32>
    %9 = arith.maximumf %7, %8 : vector<32x512xf32>
    %c0_6 = arith.constant 0 : index
    %c0_7 = arith.constant 0 : index
    %c0_8 = arith.constant 0 : index
    %10 = vector.load %arg3[%c0_6, %c0_7, %c0_8] : memref<6x32x32xf32, #tpu.memory_space<vmem>>, vector<1x32x32xf32>
    %11 = vector.shape_cast %10 : vector<1x32x32xf32> to vector<32x32xf32>
    %cst_9 = arith.constant dense<0.000000e+00> : vector<32x512xf32>
    %12 = tpu.matmul %11, %9, %cst_9 {dimension_numbers = #tpu.dot_dimension_numbers<[1], [0], [0], [1], [0, 0, 1, 1], [], []>} : vector<32x32xf32>, vector<32x512xf32>, vector<32x512xf32> -> vector<32x512xf32>
    %c32 = arith.constant 32 : index
    %c0_10 = arith.constant 0 : index
    %13 = vector.load %arg10[%c32, %c0_10] : memref<320x1xf32, #tpu.memory_space<vmem>>, vector<32x1xf32>
    %14 = vector.broadcast %13 : vector<32x1xf32> to vector<32x512xf32>
    %15 = arith.addf %12, %14 : vector<32x512xf32>
    %cst_11 = arith.constant 0.000000e+00 : f32
    %16 = vector.broadcast %cst_11 : f32 to vector<32x512xf32>
    %17 = arith.maximumf %15, %16 : vector<32x512xf32>
    %c1 = arith.constant 1 : index
    %c0_12 = arith.constant 0 : index
    %c0_13 = arith.constant 0 : index
    %18 = vector.load %arg3[%c1, %c0_12, %c0_13] : memref<6x32x32xf32, #tpu.memory_space<vmem>>, vector<1x32x32xf32>
    %19 = vector.shape_cast %18 : vector<1x32x32xf32> to vector<32x32xf32>
    %cst_14 = arith.constant dense<0.000000e+00> : vector<32x512xf32>
    %20 = tpu.matmul %19, %17, %cst_14 {dimension_numbers = #tpu.dot_dimension_numbers<[1], [0], [0], [1], [0, 0, 1, 1], [], []>} : vector<32x32xf32>, vector<32x512xf32>, vector<32x512xf32> -> vector<32x512xf32>
    %c64 = arith.constant 64 : index
    %c0_15 = arith.constant 0 : index
    %21 = vector.load %arg10[%c64, %c0_15] : memref<320x1xf32, #tpu.memory_space<vmem>>, vector<32x1xf32>
    %22 = vector.broadcast %21 : vector<32x1xf32> to vector<32x512xf32>
    %23 = arith.addf %20, %22 : vector<32x512xf32>
    %cst_16 = arith.constant 0.000000e+00 : f32
    %24 = vector.broadcast %cst_16 : f32 to vector<32x512xf32>
    %25 = arith.maximumf %23, %24 : vector<32x512xf32>
    %c2 = arith.constant 2 : index
    %c0_17 = arith.constant 0 : index
    %c0_18 = arith.constant 0 : index
    %26 = vector.load %arg3[%c2, %c0_17, %c0_18] : memref<6x32x32xf32, #tpu.memory_space<vmem>>, vector<1x32x32xf32>
    %27 = vector.shape_cast %26 : vector<1x32x32xf32> to vector<32x32xf32>
    %cst_19 = arith.constant dense<0.000000e+00> : vector<32x512xf32>
    %28 = tpu.matmul %27, %25, %cst_19 {dimension_numbers = #tpu.dot_dimension_numbers<[1], [0], [0], [1], [0, 0, 1, 1], [], []>} : vector<32x32xf32>, vector<32x512xf32>, vector<32x512xf32> -> vector<32x512xf32>
    %c96 = arith.constant 96 : index
    %c0_20 = arith.constant 0 : index
    %29 = vector.load %arg10[%c96, %c0_20] : memref<320x1xf32, #tpu.memory_space<vmem>>, vector<32x1xf32>
    %30 = vector.broadcast %29 : vector<32x1xf32> to vector<32x512xf32>
    %31 = arith.addf %28, %30 : vector<32x512xf32>
    %cst_21 = arith.constant 0.000000e+00 : f32
    %32 = vector.broadcast %cst_21 : f32 to vector<32x512xf32>
    %33 = arith.maximumf %31, %32 : vector<32x512xf32>
    %c3 = arith.constant 3 : index
    %c0_22 = arith.constant 0 : index
    %c0_23 = arith.constant 0 : index
    %34 = vector.load %arg3[%c3, %c0_22, %c0_23] : memref<6x32x32xf32, #tpu.memory_space<vmem>>, vector<1x32x32xf32>
    %35 = vector.shape_cast %34 : vector<1x32x32xf32> to vector<32x32xf32>
    %cst_24 = arith.constant dense<0.000000e+00> : vector<32x512xf32>
    %36 = tpu.matmul %35, %33, %cst_24 {dimension_numbers = #tpu.dot_dimension_numbers<[1], [0], [0], [1], [0, 0, 1, 1], [], []>} : vector<32x32xf32>, vector<32x512xf32>, vector<32x512xf32> -> vector<32x512xf32>
    %c128 = arith.constant 128 : index
    %c0_25 = arith.constant 0 : index
    %37 = vector.load %arg10[%c128, %c0_25] : memref<320x1xf32, #tpu.memory_space<vmem>>, vector<32x1xf32>
    %38 = vector.broadcast %37 : vector<32x1xf32> to vector<32x512xf32>
    %39 = arith.addf %36, %38 : vector<32x512xf32>
    %cst_26 = arith.constant 0.000000e+00 : f32
    %40 = vector.broadcast %cst_26 : f32 to vector<32x512xf32>
    %41 = arith.maximumf %39, %40 : vector<32x512xf32>
    %c0_27 = arith.constant 0 : index
    %c0_28 = arith.constant 0 : index
    %42 = vector.load %arg4[%c0_27, %c0_28] : memref<32x16xf32, #tpu.memory_space<vmem>>, vector<32x16xf32>
    %cst_29 = arith.constant dense<0.000000e+00> : vector<32x512xf32>
    %43 = tpu.matmul %42, %1, %cst_29 {dimension_numbers = #tpu.dot_dimension_numbers<[1], [0], [0], [1], [0, 0, 1, 1], [], []>} : vector<32x16xf32>, vector<16x512xf32>, vector<32x512xf32> -> vector<32x512xf32>
    %c0_30 = arith.constant 0 : index
    %c0_31 = arith.constant 0 : index
    %44 = vector.load %arg5[%c0_30, %c0_31] : memref<32x32xf32, #tpu.memory_space<vmem>>, vector<32x32xf32>
    %cst_32 = arith.constant dense<0.000000e+00> : vector<32x512xf32>
    %45 = tpu.matmul %44, %41, %cst_32 {dimension_numbers = #tpu.dot_dimension_numbers<[1], [0], [0], [1], [0, 0, 1, 1], [], []>} : vector<32x32xf32>, vector<32x512xf32>, vector<32x512xf32> -> vector<32x512xf32>
    %46 = arith.addf %43, %45 : vector<32x512xf32>
    %c160 = arith.constant 160 : index
    %c0_33 = arith.constant 0 : index
    %47 = vector.load %arg10[%c160, %c0_33] : memref<320x1xf32, #tpu.memory_space<vmem>>, vector<32x1xf32>
    %48 = vector.broadcast %47 : vector<32x1xf32> to vector<32x512xf32>
    %49 = arith.addf %46, %48 : vector<32x512xf32>
    %cst_34 = arith.constant 0.000000e+00 : f32
    %50 = vector.broadcast %cst_34 : f32 to vector<32x512xf32>
    %51 = arith.maximumf %49, %50 : vector<32x512xf32>
    %c4 = arith.constant 4 : index
    %c0_35 = arith.constant 0 : index
    %c0_36 = arith.constant 0 : index
    %52 = vector.load %arg3[%c4, %c0_35, %c0_36] : memref<6x32x32xf32, #tpu.memory_space<vmem>>, vector<1x32x32xf32>
    %53 = vector.shape_cast %52 : vector<1x32x32xf32> to vector<32x32xf32>
    %cst_37 = arith.constant dense<0.000000e+00> : vector<32x512xf32>
    %54 = tpu.matmul %53, %51, %cst_37 {dimension_numbers = #tpu.dot_dimension_numbers<[1], [0], [0], [1], [0, 0, 1, 1], [], []>} : vector<32x32xf32>, vector<32x512xf32>, vector<32x512xf32> -> vector<32x512xf32>
    %c192 = arith.constant 192 : index
    %c0_38 = arith.constant 0 : index
    %55 = vector.load %arg10[%c192, %c0_38] : memref<320x1xf32, #tpu.memory_space<vmem>>, vector<32x1xf32>
    %56 = vector.broadcast %55 : vector<32x1xf32> to vector<32x512xf32>
    %57 = arith.addf %54, %56 : vector<32x512xf32>
    %cst_39 = arith.constant 0.000000e+00 : f32
    %58 = vector.broadcast %cst_39 : f32 to vector<32x512xf32>
    %59 = arith.maximumf %57, %58 : vector<32x512xf32>
    %c5 = arith.constant 5 : index
    %c0_40 = arith.constant 0 : index
    %c0_41 = arith.constant 0 : index
    %60 = vector.load %arg3[%c5, %c0_40, %c0_41] : memref<6x32x32xf32, #tpu.memory_space<vmem>>, vector<1x32x32xf32>
    %61 = vector.shape_cast %60 : vector<1x32x32xf32> to vector<32x32xf32>
    %cst_42 = arith.constant dense<0.000000e+00> : vector<32x512xf32>
    %62 = tpu.matmul %61, %59, %cst_42 {dimension_numbers = #tpu.dot_dimension_numbers<[1], [0], [0], [1], [0, 0, 1, 1], [], []>} : vector<32x32xf32>, vector<32x512xf32>, vector<32x512xf32> -> vector<32x512xf32>
    %c224 = arith.constant 224 : index
    %c0_43 = arith.constant 0 : index
    %63 = vector.load %arg10[%c224, %c0_43] : memref<320x1xf32, #tpu.memory_space<vmem>>, vector<32x1xf32>
    %64 = vector.broadcast %63 : vector<32x1xf32> to vector<32x512xf32>
    %65 = arith.addf %62, %64 : vector<32x512xf32>
    %cst_44 = arith.constant 0.000000e+00 : f32
    %66 = vector.broadcast %cst_44 : f32 to vector<32x512xf32>
    %67 = arith.maximumf %65, %66 : vector<32x512xf32>
    %c0_45 = arith.constant 0 : index
    %c0_46 = arith.constant 0 : index
    %68 = vector.load %arg6[%c0_45, %c0_46] : memref<33x32xf32, #tpu.memory_space<vmem>>, vector<33x32xf32>
    %cst_47 = arith.constant dense<0.000000e+00> : vector<33x512xf32>
    %69 = tpu.matmul %68, %67, %cst_47 {dimension_numbers = #tpu.dot_dimension_numbers<[1], [0], [0], [1], [0, 0, 1, 1], [], []>} : vector<33x32xf32>, vector<32x512xf32>, vector<33x512xf32> -> vector<33x512xf32>
    %70 = vector.extract_strided_slice %69 {offsets = [0, 0], sizes = [32, 512], strides = [1, 1]} : vector<33x512xf32> to vector<32x512xf32>
    %c256 = arith.constant 256 : index
    %c0_48 = arith.constant 0 : index
    %71 = vector.load %arg10[%c256, %c0_48] : memref<320x1xf32, #tpu.memory_space<vmem>>, vector<32x1xf32>
    %72 = vector.broadcast %71 : vector<32x1xf32> to vector<32x512xf32>
    %73 = arith.addf %70, %72 : vector<32x512xf32>
    %74 = vector.extract_strided_slice %69 {offsets = [32, 0], sizes = [1, 512], strides = [1, 1]} : vector<33x512xf32> to vector<1x512xf32>
    %c288 = arith.constant 288 : index
    %c0_49 = arith.constant 0 : index
    %75 = vector.load %arg10[%c288, %c0_49] : memref<320x1xf32, #tpu.memory_space<vmem>>, vector<1x1xf32>
    %76 = vector.broadcast %75 : vector<1x1xf32> to vector<1x512xf32>
    %77 = arith.addf %74, %76 : vector<1x512xf32>
    %c0_50 = arith.constant 0 : index
    %c0_51 = arith.constant 0 : index
    %78 = vector.load %arg7[%c0_50, %c0_51] : memref<16x32xf32, #tpu.memory_space<vmem>>, vector<16x32xf32>
    %cst_52 = arith.constant dense<0.000000e+00> : vector<16x512xf32>
    %79 = tpu.matmul %78, %73, %cst_52 {dimension_numbers = #tpu.dot_dimension_numbers<[1], [0], [0], [1], [0, 0, 1, 1], [], []>} : vector<16x32xf32>, vector<32x512xf32>, vector<16x512xf32> -> vector<16x512xf32>
    %c0_53 = arith.constant 0 : index
    %c0_54 = arith.constant 0 : index
    %80 = vector.load %arg8[%c0_53, %c0_54] : memref<16x8xf32, #tpu.memory_space<vmem>>, vector<16x8xf32>
    %cst_55 = arith.constant dense<0.000000e+00> : vector<16x512xf32>
    %81 = tpu.matmul %80, %2, %cst_55 {dimension_numbers = #tpu.dot_dimension_numbers<[1], [0], [0], [1], [0, 0, 1, 1], [], []>} : vector<16x8xf32>, vector<8x512xf32>, vector<16x512xf32> -> vector<16x512xf32>
    %82 = arith.addf %79, %81 : vector<16x512xf32>
    %c296 = arith.constant 296 : index
    %c0_56 = arith.constant 0 : index
    %83 = vector.load %arg10[%c296, %c0_56] : memref<320x1xf32, #tpu.memory_space<vmem>>, vector<16x1xf32>
    %84 = vector.broadcast %83 : vector<16x1xf32> to vector<16x512xf32>
    %85 = arith.addf %82, %84 : vector<16x512xf32>
    %cst_57 = arith.constant 0.000000e+00 : f32
    %86 = vector.broadcast %cst_57 : f32 to vector<16x512xf32>
    %87 = arith.maximumf %85, %86 : vector<16x512xf32>
    %c0_58 = arith.constant 0 : index
    %c0_59 = arith.constant 0 : index
    %88 = vector.load %arg9[%c0_58, %c0_59] : memref<3x16xf32, #tpu.memory_space<vmem>>, vector<3x16xf32>
    %cst_60 = arith.constant dense<0.000000e+00> : vector<3x512xf32>
    %89 = tpu.matmul %88, %87, %cst_60 {dimension_numbers = #tpu.dot_dimension_numbers<[1], [0], [0], [1], [0, 0, 1, 1], [], []>} : vector<3x16xf32>, vector<16x512xf32>, vector<3x512xf32> -> vector<3x512xf32>
    %c312 = arith.constant 312 : index
    %c0_61 = arith.constant 0 : index
    %90 = vector.load %arg10[%c312, %c0_61] : memref<320x1xf32, #tpu.memory_space<vmem>>, vector<3x1xf32>
    %91 = vector.broadcast %90 : vector<3x1xf32> to vector<3x512xf32>
    %92 = arith.addf %89, %91 : vector<3x512xf32>
    %c0_62 = arith.constant 0 : index
    %c0_63 = arith.constant 0 : index
    %93 = vector.load %arg11[%c0_62, %c0_63] : memref<4x512xf32, #tpu.memory_space<vmem>>, vector<3x512xf32>
    tpu.vector_store %arg11[%c0_62, %c0_63], %92 {strides = array<i32>} : memref<4x512xf32, #tpu.memory_space<vmem>>, vector<3x512xf32>,
    %c3_64 = arith.constant 3 : index
    %c0_65 = arith.constant 0 : index
    %94 = vector.load %arg11[%c3_64, %c0_65] : memref<4x512xf32, #tpu.memory_space<vmem>>, vector<1x512xf32>
    tpu.vector_store %arg11[%c3_64, %c0_65], %77 {strides = array<i32>} : memref<4x512xf32, #tpu.memory_space<vmem>>, vector<1x512xf32>,
    return
  }
  func.func @transform_0(%arg0: i32) -> (i32, i32) {
    %c0_i32 = arith.constant 0 : i32
    %c0_i32_0 = arith.constant 0 : i32
    return %c0_i32, %arg0 : i32, i32
  }
  func.func @transform_1(%arg0: i32) -> (i32, i32) {
    %c0_i32 = arith.constant 0 : i32
    %c0_i32_0 = arith.constant 0 : i32
    %c0_i32_1 = arith.constant 0 : i32
    return %c0_i32, %c0_i32_0 : i32, i32
  }
  func.func @transform_2(%arg0: i32) -> (i32, i32, i32) {
    %c0_i32 = arith.constant 0 : i32
    %c0_i32_0 = arith.constant 0 : i32
    %c0_i32_1 = arith.constant 0 : i32
    %c0_i32_2 = arith.constant 0 : i32
    return %c0_i32, %c0_i32_0, %c0_i32_1 : i32, i32, i32
  }
  func.func @transform_3(%arg0: i32) -> (i32, i32) {
    %c0_i32 = arith.constant 0 : i32
    %c0_i32_0 = arith.constant 0 : i32
    %c0_i32_1 = arith.constant 0 : i32
    return %c0_i32, %c0_i32_0 : i32, i32
  }
  func.func @transform_4(%arg0: i32) -> (i32, i32) {
    %c0_i32 = arith.constant 0 : i32
    %c0_i32_0 = arith.constant 0 : i32
    %c0_i32_1 = arith.constant 0 : i32
    return %c0_i32, %c0_i32_0 : i32, i32
  }
  func.func @transform_5(%arg0: i32) -> (i32, i32) {
    %c0_i32 = arith.constant 0 : i32
    %c0_i32_0 = arith.constant 0 : i32
    %c0_i32_1 = arith.constant 0 : i32
    return %c0_i32, %c0_i32_0 : i32, i32
  }
  func.func @transform_6(%arg0: i32) -> (i32, i32) {
    %c0_i32 = arith.constant 0 : i32
    %c0_i32_0 = arith.constant 0 : i32
    %c0_i32_1 = arith.constant 0 : i32
    return %c0_i32, %c0_i32_0 : i32, i32
  }
  func.func @transform_7(%arg0: i32) -> (i32, i32) {
    %c0_i32 = arith.constant 0 : i32
    %c0_i32_0 = arith.constant 0 : i32
    %c0_i32_1 = arith.constant 0 : i32
    return %c0_i32, %c0_i32_0 : i32, i32
  }
  func.func @transform_8(%arg0: i32) -> (i32, i32) {
    %c0_i32 = arith.constant 0 : i32
    %c0_i32_0 = arith.constant 0 : i32
    %c0_i32_1 = arith.constant 0 : i32
    return %c0_i32, %c0_i32_0 : i32, i32
  }
  func.func @transform_9(%arg0: i32) -> (i32, i32) {
    %c0_i32 = arith.constant 0 : i32
    %c0_i32_0 = arith.constant 0 : i32
    %c0_i32_1 = arith.constant 0 : i32
    return %c0_i32, %c0_i32_0 : i32, i32
  }
  func.func @transform_10(%arg0: i32) -> (i32, i32) {
    %c0_i32 = arith.constant 0 : i32
    %c0_i32_0 = arith.constant 0 : i32
    return %c0_i32, %arg0 : i32, i32
  }
}

</mosaic_0001>

<llo_original>
// kernel: tpu_custom_call.1
$region0: #{tpu_custom_call.1}
  #allocation0 [shape = 'u32[]', space=smem, size = 0x4, offset = 0x4, fixed_abs, tag = 'smem constant byte address 0x4 - core index']
  #allocation1 [shape = 'u32[72,128]{1,0:T(1,128)}', space=vmem, size = 0x9000, scoped, tag = 'internal scratch']
  %s0 = inlined_call_operand.vmem [shape: f32[24,1024], index: 0, kind: input, shape index: {}]
  %s1 = inlined_call_operand.vmem [shape: f32[32,16], index: 1, kind: input, shape index: {}]
  %s2 = inlined_call_operand.vmem [shape: f32[6,32,32], index: 2, kind: input, shape index: {}]
  %s3 = inlined_call_operand.vmem [shape: f32[32,16], index: 3, kind: input, shape index: {}]
  %s4 = inlined_call_operand.vmem [shape: f32[32,32], index: 4, kind: input, shape index: {}]
  %s5 = inlined_call_operand.vmem [shape: f32[33,32], index: 5, kind: input, shape index: {}]
  %s6 = inlined_call_operand.vmem [shape: f32[16,32], index: 6, kind: input, shape index: {}]
  %s7 = inlined_call_operand.vmem [shape: f32[16,8], index: 7, kind: input, shape index: {}]
  %s8 = inlined_call_operand.vmem [shape: f32[3,16], index: 8, kind: input, shape index: {}]
  %s9 = inlined_call_operand.vmem [shape: f32[320,1], index: 9, kind: input, shape index: {}]
  %s10 = inlined_call_operand.hbm [shape: f32[4,1024], index: 10, kind: output, shape index: {}]
  %s11 = sld [smem:[#allocation0]]
  $region96: #{tpu_custom_call.1} parent=0
    _
  %s13 = ssub.s32 1, %s11
  %s14 = scalar_select 0, %s13, %s11
  $region1: #{tpu_custom_call.1} parent=0
    #allocation2 [shape = 'u8[98304]{0}', space=vmem, size = 0x18000, scoped, tag = 'input window, operand 0']
    #allocation3 [shape = 'u8[16384]{0}', space=vmem, size = 0x4000, scoped, tag = 'output window, operand 0']
    #allocation4 [shape = 's32[2]{0}', space=sflag, size = 0x8, scoped, tag = 'scoped memory for tpu_custom_call.1']
    %15 = vsyncpa [#allocation4], 0
    %s16 = scalar_lea.sflag [#allocation4], 1
    %17 = vsyncpa %s16, 0
    loop: start=0, step=1, limit=4
    $region2: #{tpu_custom_call.1} parent=1 // loop_pre_header
      _
    $region3: #{tpu_custom_call.1} parent=1 // loop_header
      %s19 = sphi 0, %s23
      %p20 = scmp.ge.s32.totalorder %s19, 4
      %s29 = sphi 0, %s31
      %s32 = sphi 0, %s29
      %s33 = sphi 0, %s32
      %s49 = sphi 0, %s33
      %s53 = sphi 0, %s53
      %s55 = sphi 0, %s53
      %s56 = sphi 0, %s55
      %s70 = sphi 0, %s56
      %s74 = sphi 0, %s74
      %s76 = sphi 0, %s74
      %s77 = sphi 0, %s76
      %s91 = sphi 0, %s77
      %s95 = sphi 0, %s95
      %s97 = sphi 0, %s95
      %s98 = sphi 0, %s97
      %s112 = sphi 0, %s98
      %s116 = sphi 0, %s116
      %s118 = sphi 0, %s116
      %s119 = sphi 0, %s118
      %s133 = sphi 0, %s119
      %s137 = sphi 0, %s137
      %s139 = sphi 0, %s137
      %s140 = sphi 0, %s139
      %s154 = sphi 0, %s140
      %s158 = sphi 0, %s158
      %s160 = sphi 0, %s158
      %s161 = sphi 0, %s160
      %s175 = sphi 0, %s161
      %s179 = sphi 0, %s179
      %s181 = sphi 0, %s179
      %s182 = sphi 0, %s181
      %s196 = sphi 0, %s182
      %s200 = sphi 0, %s200
      %s202 = sphi 0, %s200
      %s203 = sphi 0, %s202
      %s217 = sphi 0, %s203
      %s221 = sphi 0, %s221
      %s223 = sphi 0, %s221
      %s224 = sphi 0, %s223
      %s238 = sphi 0, %s224
      %s244 = sphi 0, %s246
      %s247 = sphi 0, %s244
      %s248 = sphi 0, %s247
      %s264 = sphi 0, %s248
    $region4: #{tpu_custom_call.1} parent=1 // loop_header_branch
      %22 = sbr.rel (%p20) target = $region8
    $region5: #{tpu_custom_call.1} parent=1 // loop_body
      %s24 = ssub.s32 %s19, 1
      %s25 = ssub.s32 %s19, 2
      %s26 = sadd.s32 %s19, 1
      %s27 = ssub.s32 %s19, %s26
      %p28 = scmp.eq.s32.totalorder %s27, 0
      %s30 = sadd.s32 %s29, 1
      %s31 = scalar_select %p28, %s29, %s30
      %p34 = pneg %p28
      %p35 = scmp.eq.s32.totalorder %s19, 1
      %p36 = por %p34, %p35
      %p37 = scmp.ne.s32.totalorder %s29, %s32
      %p38 = scmp.eq.s32.totalorder %s19, 0
      %p39 = por %p37, %p38
      %p40 = scmp.ne.s32.totalorder %s29, %s32
      %p41 = scmp.eq.s32.totalorder %s24, 1
      %p42 = por %p40, %p41
      %p43 = scmp.ne.s32.totalorder %s32, %s33
      %p44 = scmp.eq.s32.totalorder %s24, 0
      %p45 = por %p43, %p44
      %p46 = scmp.ne.s32.totalorder %s32, %s33
      %p47 = scmp.eq.s32.totalorder %s25, 1
      %p48 = por %p46, %p47
      %p50 = scmp.ne.s32.totalorder %s33, %s49
      %p51 = scmp.eq.s32.totalorder %s25, 0
      %p52 = por %p50, %p51
      %s54 = sadd.s32 %s53, 1
      %p57 = scmp.eq.s32.totalorder %s19, 1
      %p58 = scmp.ne.s32.totalorder %s53, %s55
      %p59 = scmp.eq.s32.totalorder %s19, 0
      %p60 = por %p58, %p59
      %p61 = scmp.ne.s32.totalorder %s53, %s55
      %p62 = scmp.eq.s32.totalorder %s24, 1
      %p63 = por %p61, %p62
      %p64 = scmp.ne.s32.totalorder %s55, %s56
      %p65 = scmp.eq.s32.totalorder %s24, 0
      %p66 = por %p64, %p65
      %p67 = scmp.ne.s32.totalorder %s55, %s56
      %p68 = scmp.eq.s32.totalorder %s25, 1
      %p69 = por %p67, %p68
      %p71 = scmp.ne.s32.totalorder %s56, %s70
      %p72 = scmp.eq.s32.totalorder %s25, 0
      %p73 = por %p71, %p72
      %s75 = sadd.s32 %s74, 1
      %p78 = scmp.eq.s32.totalorder %s19, 1
      %p79 = scmp.ne.s32.totalorder %s74, %s76
      %p80 = scmp.eq.s32.totalorder %s19, 0
      %p81 = por %p79, %p80
      %p82 = scmp.ne.s32.totalorder %s74, %s76
      %p83 = scmp.eq.s32.totalorder %s24, 1
      %p84 = por %p82, %p83
      %p85 = scmp.ne.s32.totalorder %s76, %s77
      %p86 = scmp.eq.s32.totalorder %s24, 0
      %p87 = por %p85, %p86
      %p88 = scmp.ne.s32.totalorder %s76, %s77
      %p89 = scmp.eq.s32.totalorder %s25, 1
      %p90 = por %p88, %p89
      %p92 = scmp.ne.s32.totalorder %s77, %s91
      %p93 = scmp.eq.s32.totalorder %s25, 0
      %p94 = por %p92, %p93
      %s96 = sadd.s32 %s95, 1
      %p99 = scmp.eq.s32.totalorder %s19, 1
      %p100 = scmp.ne.s32.totalorder %s95, %s97
      %p101 = scmp.eq.s32.totalorder %s19, 0
      %p102 = por %p100, %p101
      %p103 = scmp.ne.s32.totalorder %s95, %s97
      %p104 = scmp.eq.s32.totalorder %s24, 1
      %p105 = por %p103, %p104
      %p106 = scmp.ne.s32.totalorder %s97, %s98
      %p107 = scmp.eq.s32.totalorder %s24, 0
      %p108 = por %p106, %p107
      %p109 = scmp.ne.s32.totalorder %s97, %s98
      %p110 = scmp.eq.s32.totalorder %s25, 1
      %p111 = por %p109, %p110
      %p113 = scmp.ne.s32.totalorder %s98, %s112
      %p114 = scmp.eq.s32.totalorder %s25, 0
      %p115 = por %p113, %p114
      %s117 = sadd.s32 %s116, 1
      %p120 = scmp.eq.s32.totalorder %s19, 1
      %p121 = scmp.ne.s32.totalorder %s116, %s118
      %p122 = scmp.eq.s32.totalorder %s19, 0
      %p123 = por %p121, %p122
      %p124 = scmp.ne.s32.totalorder %s116, %s118
      %p125 = scmp.eq.s32.totalorder %s24, 1
      %p126 = por %p124, %p125
      %p127 = scmp.ne.s32.totalorder %s118, %s119
      %p128 = scmp.eq.s32.totalorder %s24, 0
      %p129 = por %p127, %p128
      %p130 = scmp.ne.s32.totalorder %s118, %s119
      %p131 = scmp.eq.s32.totalorder %s25, 1
      %p132 = por %p130, %p131
      %p134 = scmp.ne.s32.totalorder %s119, %s133
      %p135 = scmp.eq.s32.totalorder %s25, 0
      %p136 = por %p134, %p135
      %s138 = sadd.s32 %s137, 1
      %p141 = scmp.eq.s32.totalorder %s19, 1
      %p142 = scmp.ne.s32.totalorder %s137, %s139
      %p143 = scmp.eq.s32.totalorder %s19, 0
      %p144 = por %p142, %p143
      %p145 = scmp.ne.s32.totalorder %s137, %s139
      %p146 = scmp.eq.s32.totalorder %s24, 1
      %p147 = por %p145, %p146
      %p148 = scmp.ne.s32.totalorder %s139, %s140
      %p149 = scmp.eq.s32.totalorder %s24, 0
      %p150 = por %p148, %p149
      %p151 = scmp.ne.s32.totalorder %s139, %s140
      %p152 = scmp.eq.s32.totalorder %s25, 1
      %p153 = por %p151, %p152
      %p155 = scmp.ne.s32.totalorder %s140, %s154
      %p156 = scmp.eq.s32.totalorder %s25, 0
      %p157 = por %p155, %p156
      %s159 = sadd.s32 %s158, 1
      %p162 = scmp.eq.s32.totalorder %s19, 1
      %p163 = scmp.ne.s32.totalorder %s158, %s160
      %p164 = scmp.eq.s32.totalorder %s19, 0
      %p165 = por %p163, %p164
      %p166 = scmp.ne.s32.totalorder %s158, %s160
      %p167 = scmp.eq.s32.totalorder %s24, 1
      %p168 = por %p166, %p167
      %p169 = scmp.ne.s32.totalorder %s160, %s161
      %p170 = scmp.eq.s32.totalorder %s24, 0
      %p171 = por %p169, %p170
      %p172 = scmp.ne.s32.totalorder %s160, %s161
      %p173 = scmp.eq.s32.totalorder %s25, 1
      %p174 = por %p172, %p173
      %p176 = scmp.ne.s32.totalorder %s161, %s175
      %p177 = scmp.eq.s32.totalorder %s25, 0
      %p178 = por %p176, %p177
      %s180 = sadd.s32 %s179, 1
      %p183 = scmp.eq.s32.totalorder %s19, 1
      %p184 = scmp.ne.s32.totalorder %s179, %s181
      %p185 = scmp.eq.s32.totalorder %s19, 0
      %p186 = por %p184, %p185
      %p187 = scmp.ne.s32.totalorder %s179, %s181
      %p188 = scmp.eq.s32.totalorder %s24, 1
      %p189 = por %p187, %p188
      %p190 = scmp.ne.s32.totalorder %s181, %s182
      %p191 = scmp.eq.s32.totalorder %s24, 0
      %p192 = por %p190, %p191
      %p193 = scmp.ne.s32.totalorder %s181, %s182
      %p194 = scmp.eq.s32.totalorder %s25, 1
      %p195 = por %p193, %p194
      %p197 = scmp.ne.s32.totalorder %s182, %s196
      %p198 = scmp.eq.s32.totalorder %s25, 0
      %p199 = por %p197, %p198
      %s201 = sadd.s32 %s200, 1
      %p204 = scmp.eq.s32.totalorder %s19, 1
      %p205 = scmp.ne.s32.totalorder %s200, %s202
      %p206 = scmp.eq.s32.totalorder %s19, 0
      %p207 = por %p205, %p206
      %p208 = scmp.ne.s32.totalorder %s200, %s202
      %p209 = scmp.eq.s32.totalorder %s24, 1
      %p210 = por %p208, %p209
      %p211 = scmp.ne.s32.totalorder %s202, %s203
      %p212 = scmp.eq.s32.totalorder %s24, 0
      %p213 = por %p211, %p212
      %p214 = scmp.ne.s32.totalorder %s202, %s203
      %p215 = scmp.eq.s32.totalorder %s25, 1
      %p216 = por %p214, %p215
      %p218 = scmp.ne.s32.totalorder %s203, %s217
      %p219 = scmp.eq.s32.totalorder %s25, 0
      %p220 = por %p218, %p219
      %s222 = sadd.s32 %s221, 1
      %p225 = scmp.eq.s32.totalorder %s19, 1
      %p226 = scmp.ne.s32.totalorder %s221, %s223
      %p227 = scmp.eq.s32.totalorder %s19, 0
      %p228 = por %p226, %p227
      %p229 = scmp.ne.s32.totalorder %s221, %s223
      %p230 = scmp.eq.s32.totalorder %s24, 1
      %p231 = por %p229, %p230
      %p232 = scmp.ne.s32.totalorder %s223, %s224
      %p233 = scmp.eq.s32.totalorder %s24, 0
      %p234 = por %p232, %p233
      %p235 = scmp.ne.s32.totalorder %s223, %s224
      %p236 = scmp.eq.s32.totalorder %s25, 1
      %p237 = por %p235, %p236
      %p239 = scmp.ne.s32.totalorder %s224, %s238
      %p240 = scmp.eq.s32.totalorder %s25, 0
      %p241 = por %p239, %p240
      %s242 = ssub.s32 %s19, %s26
      %p243 = scmp.eq.s32.totalorder %s242, 0
      %s245 = sadd.s32 %s244, 1
      %s246 = scalar_select %p243, %s244, %s245
      %p249 = pneg %p243
      %p250 = scmp.eq.s32.totalorder %s19, 1
      %p251 = por %p249, %p250
      %p252 = scmp.ne.s32.totalorder %s244, %s247
      %p253 = scmp.eq.s32.totalorder %s19, 0
      %p254 = por %p252, %p253
      %p255 = scmp.ne.s32.totalorder %s244, %s247
      %p256 = scmp.eq.s32.totalorder %s24, 1
      %p257 = por %p255, %p256
      %p258 = scmp.ne.s32.totalorder %s247, %s248
      %p259 = scmp.eq.s32.totalorder %s24, 0
      %p260 = por %p258, %p259
      %p261 = scmp.ne.s32.totalorder %s247, %s248
      %p262 = scmp.eq.s32.totalorder %s25, 1
      %p263 = por %p261, %p262
      %p265 = scmp.ne.s32.totalorder %s248, %s264
      %p266 = scmp.eq.s32.totalorder %s25, 0
      %p267 = por %p265, %p266
      %p268 = scmp.le.s32.totalorder 1, %s19
      %p269 = scmp.lt.s32.totalorder %s19, 3
      %p270 = pnand %p268, %p269
      %p271 = pneg %p270
      // Predicated region
      $region9: #{tpu_custom_call.1} parent=5 // pred_check
        _
      $region10: #{tpu_custom_call.1} parent=5 // pred_check_branch
        %273 = sbr.rel (%p270) target = $region12
      $region11: #{tpu_custom_call.1} parent=5 // pred_region
        %s274 = ssub.s32 %s19, 1
        // Predicated region
        $region13: #{tpu_custom_call.1} parent=11 // pred_check
          %p275 = pneg %p66
        $region14: #{tpu_custom_call.1} parent=11 // pred_check_branch
          %277 = sbr.rel (%p275) target = $region16
        $region15: #{tpu_custom_call.1} parent=11 // pred_region
          _
        $region16: #{tpu_custom_call.1} parent=11 // pred_fallthru
          _
        // Predicated region
        $region17: #{tpu_custom_call.1} parent=11 // pred_check
          %p278 = pneg %p87
        $region18: #{tpu_custom_call.1} parent=11 // pred_check_branch
          %280 = sbr.rel (%p278) target = $region20
        $region19: #{tpu_custom_call.1} parent=11 // pred_region
          _
        $region20: #{tpu_custom_call.1} parent=11 // pred_fallthru
          _
        // Predicated region
        $region21: #{tpu_custom_call.1} parent=11 // pred_check
          %p281 = pneg %p108
        $region22: #{tpu_custom_call.1} parent=11 // pred_check_branch
          %283 = sbr.rel (%p281) target = $region24
        $region23: #{tpu_custom_call.1} parent=11 // pred_region
          _
        $region24: #{tpu_custom_call.1} parent=11 // pred_fallthru
          _
        // Predicated region
        $region25: #{tpu_custom_call.1} parent=11 // pred_check
          %p284 = pneg %p129
        $region26: #{tpu_custom_call.1} parent=11 // pred_check_branch
          %286 = sbr.rel (%p284) target = $region28
        $region27: #{tpu_custom_call.1} parent=11 // pred_region
          _
        $region28: #{tpu_custom_call.1} parent=11 // pred_fallthru
          _
        // Predicated region
        $region29: #{tpu_custom_call.1} parent=11 // pred_check
          %p287 = pneg %p150
        $region30: #{tpu_custom_call.1} parent=11 // pred_check_branch
          %289 = sbr.rel (%p287) target = $region32
        $region31: #{tpu_custom_call.1} parent=11 // pred_region
          _
        $region32: #{tpu_custom_call.1} parent=11 // pred_fallthru
          _
        // Predicated region
        $region33: #{tpu_custom_call.1} parent=11 // pred_check
          %p290 = pneg %p171
        $region34: #{tpu_custom_call.1} parent=11 // pred_check_branch
          %292 = sbr.rel (%p290) target = $region36
        $region35: #{tpu_custom_call.1} parent=11 // pred_region
          _
        $region36: #{tpu_custom_call.1} parent=11 // pred_fallthru
          _
        // Predicated region
        $region37: #{tpu_custom_call.1} parent=11 // pred_check
          %p293 = pneg %p192
        $region38: #{tpu_custom_call.1} parent=11 // pred_check_branch
          %295 = sbr.rel (%p293) target = $region40
        $region39: #{tpu_custom_call.1} parent=11 // pred_region
          _
        $region40: #{tpu_custom_call.1} parent=11 // pred_fallthru
          _
        // Predicated region
        $region41: #{tpu_custom_call.1} parent=11 // pred_check
          %p296 = pneg %p213
        $region42: #{tpu_custom_call.1} parent=11 // pred_check_branch
          %298 = sbr.rel (%p296) target = $region44
        $region43: #{tpu_custom_call.1} parent=11 // pred_region
          _
        $region44: #{tpu_custom_call.1} parent=11 // pred_fallthru
          _
        // Predicated region
        $region45: #{tpu_custom_call.1} parent=11 // pred_check
          %p299 = pneg %p234
        $region46: #{tpu_custom_call.1} parent=11 // pred_check_branch
          %301 = sbr.rel (%p299) target = $region48
        $region47: #{tpu_custom_call.1} parent=11 // pred_region
          _
        $region48: #{tpu_custom_call.1} parent=11 // pred_fallthru
          _
      $region12: #{tpu_custom_call.1} parent=5 // pred_fallthru
        _
      %p302 = scmp.lt.s32.totalorder %s19, 2
      // Predicated region
      $region49: #{tpu_custom_call.1} parent=5 // pred_check
        %p303 = pneg %p302
      $region50: #{tpu_custom_call.1} parent=5 // pred_check_branch
        %305 = sbr.rel (%p303) target = $region52
      $region51: #{tpu_custom_call.1} parent=5 // pred_region
        // Predicated region
        $region53: #{tpu_custom_call.1} parent=51 // pred_check
          %p306 = pneg %p39
        $region54: #{tpu_custom_call.1} parent=51 // pred_check_branch
          %308 = sbr.rel (%p306) target = $region56
        $region55: #{tpu_custom_call.1} parent=51 // pred_region
          %s309 = sand.u32 %s29, 1
          %s310 = sand.u32 %s29, 1
          %s311 = smul.addr %s310, 96
          %s312 = scalar_lea.vmem [#allocation2], %s311
          %s313 = smul.u32 4, %s19
          %s314 = smul.addr %s313, 8
          %s315 = scalar_lea.vmem %s0, %s314
          // Predicated region
          $region57: #{tpu_custom_call.1} parent=55 // pred_check
            _
          $region58: #{tpu_custom_call.1} parent=55 // pred_check_branch
            %317 = sbr.rel (0) target = $region60
          $region59: #{tpu_custom_call.1} parent=55 // pred_region
            // Predicated region
            $region61: #{tpu_custom_call.1} parent=59 // pred_check
              _
            $region62: #{tpu_custom_call.1} parent=59 // pred_check_branch
              %319 = sbr.rel (0) target = $region64
            $region63: #{tpu_custom_call.1} parent=59 // pred_region
              loop: start=0, step=1, limit=1
              $region65: #{tpu_custom_call.1} parent=63 // loop_pre_header
                _
              $region66: #{tpu_custom_call.1} parent=63 // loop_header
                %s321 = sphi 0, %s325
                %p322 = scmp.ge.s32.totalorder %s321, 1
                %s326 = sphi %s315, %s315
                %s327 = sphi %s312, %s312
              $region67: #{tpu_custom_call.1} parent=63 // loop_header_branch
                %324 = sbr.rel (%p322) target = $region71
              $region68: #{tpu_custom_call.1} parent=63 // loop_body
                %v328 = vld [vmem:[%s326] sm:$0xff]
                %329 = vst [vmem:[%s327] sm:$0xff] %v328
                %v330 = vld [vmem:[%s326 + $0x8] sm:$0xff]
                %331 = vst [vmem:[%s327 + $0x8] sm:$0xff] %v330
                %v332 = vld [vmem:[%s326 + $0x10] sm:$0xff]
                %333 = vst [vmem:[%s327 + $0x10] sm:$0xff] %v332
                %v334 = vld [vmem:[%s326 + $0x18] sm:$0xff]
                %335 = vst [vmem:[%s327 + $0x18] sm:$0xff] %v334
                %v336 = vld [vmem:[%s326 + $0x40] sm:$0xff]
                %337 = vst [vmem:[%s327 + $0x20] sm:$0xff] %v336
                %v338 = vld [vmem:[%s326 + $0x48] sm:$0xff]
                %339 = vst [vmem:[%s327 + $0x28] sm:$0xff] %v338
                %v340 = vld [vmem:[%s326 + $0x50] sm:$0xff]
                %341 = vst [vmem:[%s327 + $0x30] sm:$0xff] %v340
                %v342 = vld [vmem:[%s326 + $0x58] sm:$0xff]
                %343 = vst [vmem:[%s327 + $0x38] sm:$0xff] %v342
                %v344 = vld [vmem:[%s326 + $0x80] sm:$0xff]
                %345 = vst [vmem:[%s327 + $0x40] sm:$0xff] %v344
                %v346 = vld [vmem:[%s326 + $0x88] sm:$0xff]
                %347 = vst [vmem:[%s327 + $0x48] sm:$0xff] %v346
                %v348 = vld [vmem:[%s326 + $0x90] sm:$0xff]
                %349 = vst [vmem:[%s327 + $0x50] sm:$0xff] %v348
                %v350 = vld [vmem:[%s326 + $0x98] sm:$0xff]
                %351 = vst [vmem:[%s327 + $0x58] sm:$0xff] %v350
              $region69: #{tpu_custom_call.1} parent=63 // loop_footer
                %s325 = sadd.s32 1, %s321
              $region70: #{tpu_custom_call.1} parent=63 // loop_footer_branch
                %320 = sbr.rel target = $region66
              $region71: #{tpu_custom_call.1} parent=63 // loop_exit
                _
            $region64: #{tpu_custom_call.1} parent=59 // pred_fallthru
              _
            // Predicated region
            $region72: #{tpu_custom_call.1} parent=59 // pred_check
              _
            $region73: #{tpu_custom_call.1} parent=59 // pred_check_branch
              %353 = sbr.rel target = $region75
            $region74: #{tpu_custom_call.1} parent=59 // pred_region
              _
            $region75: #{tpu_custom_call.1} parent=59 // pred_fallthru
              _
          $region60: #{tpu_custom_call.1} parent=55 // pred_fallthru
            _
          %354 = vnop
        $region56: #{tpu_custom_call.1} parent=51 // pred_fallthru
          _
      $region52: #{tpu_custom_call.1} parent=5 // pred_fallthru
        _
      %p355 = scmp.le.s32.totalorder 1, %s19
      %p356 = scmp.lt.s32.totalorder %s19, 3
      %p357 = pnand %p355, %p356
      %p358 = pneg %p357
      // Predicated region
      $region76: #{tpu_custom_call.1} parent=5 // pred_check
        _
      $region77: #{tpu_custom_call.1} parent=5 // pred_check_branch
        %360 = sbr.rel (%p357) target = $region79
      $region78: #{tpu_custom_call.1} parent=5 // pred_region
        %s361 = ssub.s32 %s19, 1
        %s362 = sand.u32 %s32, 1
        %s363 = sand.u32 %s32, 1
        %s364 = smul.addr %s363, 96
        %s365 = scalar_lea.vmem [#allocation2], %s364
        // Predicated region
        $region80: #{tpu_custom_call.1} parent=78 // pred_check
          %p366 = pneg %p45
        $region81: #{tpu_custom_call.1} parent=78 // pred_check_branch
          %368 = sbr.rel (%p366) target = $region83
        $region82: #{tpu_custom_call.1} parent=78 // pred_region
          _
        $region83: #{tpu_custom_call.1} parent=78 // pred_fallthru
          _
        %s369 = sand.u32 %s32, 1
        %s370 = sand.u32 %s32, 1
        %s371 = smul.addr %s370, 96
        %s372 = scalar_lea.vmem [#allocation2], %s371
        %p373 = pneg %p45
        %p374 = pneg %p42
        %p375 = pneg %p66
        %p376 = pneg %p63
        %p377 = pneg %p87
        %p378 = pneg %p84
        %p379 = pneg %p108
        %p380 = pneg %p105
        %p381 = pneg %p129
        %p382 = pneg %p126
        %p383 = pneg %p150
        %p384 = pneg %p147
        %p385 = pneg %p171
        %p386 = pneg %p168
        %p387 = pneg %p192
        %p388 = pneg %p189
        %p389 = pneg %p213
        %p390 = pneg %p210
        %p391 = pneg %p234
        %p392 = pneg %p231
        %p393 = pneg %p260
        %p394 = pneg %p257
        %s395 = sand.u32 %s247, 1
        %s396 = scalar_lea.sflag [#allocation4], %s395
        %s397 = sand.u32 %s247, 1
        %s398 = smul.addr %s397, 16
        %s399 = scalar_lea.vmem [#allocation3], %s398
        %s400 = smul.u32 4, %s24
        %s401 = smul.u32 4, %s24
        %v402 = vld [vmem:[%s365] sm:$0xff]
        %v403 = vld [vmem:[%s365 + $0x8] sm:$0xff]
        %v404 = vld [vmem:[%s365 + $0x10] sm:$0xff]
        %v405 = vld [vmem:[%s365 + $0x18] sm:$0xff]
        %v406 = vld [vmem:[%s365 + $0x20] sm:$0xff]
        %v407 = vld [vmem:[%s365 + $0x28] sm:$0xff]
        %v408 = vld [vmem:[%s365 + $0x30] sm:$0xff]
        %v409 = vld [vmem:[%s365 + $0x38] sm:$0xff]
        %v410 = vld [vmem:[%s365 + $0x40] sm:$0xff]
        %v411 = vld [vmem:[%s365 + $0x48] sm:$0xff]
        %v412 = vld [vmem:[%s365 + $0x50] sm:$0xff]
        %v413 = vld [vmem:[%s365 + $0x58] sm:$0xff]
        %v414 = vld [vmem:[%s1] sm:$0xff]
        %v415 = vld [vmem:[%s1 + $0x8] sm:$0xff]
        %v416 = vld [vmem:[%s1 + $0x10] sm:$0xff]
        %v417 = vld [vmem:[%s1 + $0x18] sm:$0xff]
        %v418 = vld [vmem:[%s9] sm:$0xff]
        %v419 = vld [vmem:[%s9 + $0x8] sm:$0xff]
        %v420 = vld [vmem:[%s9 + $0x10] sm:$0xff]
        %v421 = vld [vmem:[%s9 + $0x18] sm:$0xff]
        %423 = vset.pattern.permute.xlu0 0
        %424 = vperm.xlu0 %423, %v418
        %v425 = vpop.permute.xlu0 %424
        %428 = vset.pattern.permute.xlu0 0
        %429 = vperm.xlu0 %428, %v419
        %v430 = vpop.permute.xlu0 %429
        %433 = vset.pattern.permute.xlu0 0
        %434 = vperm.xlu0 %433, %v420
        %v435 = vpop.permute.xlu0 %434
        %438 = vset.pattern.permute.xlu0 0
        %439 = vperm.xlu0 %438, %v421
        %v440 = vpop.permute.xlu0 %439
        %vm442 = vcmask 130048
        %v444 = vsel %vm442, %v414, 0
        %v447 = vsel %vm442, %v415, 0
        %v450 = vsel %vm442, %v416, 0
        %v453 = vsel %vm442, %v417, 0
        %455 = vmatpush.msra.mxu0 0.0
        %456 = vmatpush.msra.mxu0 0.0
        %457 = vmatpush.msra.mxu0 0.0
        %458 = vmatpush.msra.mxu0 0.0
        %459 = vmatpush.msra.mxu0 0.0
        %460 = vmatpush.msra.mxu0 0.0
        %461 = vmatpush.msra.mxu0 0.0
        %462 = vmatpush.msra.mxu0 0.0
        %463 = vmatpush.msra.mxu0 0.0
        %464 = vmatpush.msra.mxu0 0.0
        %465 = vmatpush.msra.mxu0 0.0
        %466 = vmatpush.msra.mxu0 0.0
        %467 = vmatpush.msra.mxu0 0.0
        %468 = vmatpush.msra.mxu0 0.0
        %469 = vmatpush.msra.mxu0 %v406
        %470 = vmatpush.msra.mxu0 %v402
        %471 = vmatmul.f32.gmra.mxu0 %v444
        %v472 = vpop.f32.mrf.mxu0
        %v473 = vadd.f32 %v425, %v472
        %474 = vmatmul.f32.gmra.mxu0 %v447
        %v475 = vpop.f32.mrf.mxu0
        %v476 = vadd.f32 %v430, %v475
        %477 = vmatmul.f32.gmra.mxu0 %v450
        %v478 = vpop.f32.mrf.mxu0
        %v479 = vadd.f32 %v435, %v478
        %480 = vmatmul.f32.gmra.mxu0 %v453
        %v481 = vpop.f32.mrf.mxu0
        %v482 = vadd.f32 %v440, %v481
        %483 = vdwg.mxu0
        %484 = vmatpush.msra.mxu0 0.0
        %485 = vmatpush.msra.mxu0 0.0
        %486 = vmatpush.msra.mxu0 0.0
        %487 = vmatpush.msra.mxu0 0.0
        %488 = vmatpush.msra.mxu0 0.0
        %489 = vmatpush.msra.mxu0 0.0
        %490 = vmatpush.msra.mxu0 0.0
        %491 = vmatpush.msra.mxu0 0.0
        %492 = vmatpush.msra.mxu0 0.0
        %493 = vmatpush.msra.mxu0 0.0
        %494 = vmatpush.msra.mxu0 0.0
        %495 = vmatpush.msra.mxu0 0.0
        %496 = vmatpush.msra.mxu0 0.0
        %497 = vmatpush.msra.mxu0 0.0
        %498 = vmatpush.msra.mxu0 %v407
        %499 = vmatpush.msra.mxu0 %v403
        %500 = vmatmul.f32.gmra.mxu0 %v444
        %v501 = vpop.f32.mrf.mxu0
        %v502 = vadd.f32 %v425, %v501
        %503 = vmatmul.f32.gmra.mxu0 %v447
        %v504 = vpop.f32.mrf.mxu0
        %v505 = vadd.f32 %v430, %v504
        %506 = vmatmul.f32.gmra.mxu0 %v450
        %v507 = vpop.f32.mrf.mxu0
        %v508 = vadd.f32 %v435, %v507
        %509 = vmatmul.f32.gmra.mxu0 %v453
        %v510 = vpop.f32.mrf.mxu0
        %v511 = vadd.f32 %v440, %v510
        %512 = vdwg.mxu0
        %513 = vmatpush.msra.mxu0 0.0
        %514 = vmatpush.msra.mxu0 0.0
        %515 = vmatpush.msra.mxu0 0.0
        %516 = vmatpush.msra.mxu0 0.0
        %517 = vmatpush.msra.mxu0 0.0
        %518 = vmatpush.msra.mxu0 0.0
        %519 = vmatpush.msra.mxu0 0.0
        %520 = vmatpush.msra.mxu0 0.0
        %521 = vmatpush.msra.mxu0 0.0
        %522 = vmatpush.msra.mxu0 0.0
        %523 = vmatpush.msra.mxu0 0.0
        %524 = vmatpush.msra.mxu0 0.0
        %525 = vmatpush.msra.mxu0 0.0
        %526 = vmatpush.msra.mxu0 0.0
        %527 = vmatpush.msra.mxu0 %v408
        %528 = vmatpush.msra.mxu0 %v404
        %529 = vmatmul.f32.gmra.mxu0 %v444
        %v530 = vpop.f32.mrf.mxu0
        %v531 = vadd.f32 %v425, %v530
        %532 = vmatmul.f32.gmra.mxu0 %v447
        %v533 = vpop.f32.mrf.mxu0
        %v534 = vadd.f32 %v430, %v533
        %535 = vmatmul.f32.gmra.mxu0 %v450
        %v536 = vpop.f32.mrf.mxu0
        %v537 = vadd.f32 %v435, %v536
        %538 = vmatmul.f32.gmra.mxu0 %v453
        %v539 = vpop.f32.mrf.mxu0
        %v540 = vadd.f32 %v440, %v539
        %541 = vdwg.mxu0
        %542 = vmatpush.msra.mxu0 0.0
        %543 = vmatpush.msra.mxu0 0.0
        %544 = vmatpush.msra.mxu0 0.0
        %545 = vmatpush.msra.mxu0 0.0
        %546 = vmatpush.msra.mxu0 0.0
        %547 = vmatpush.msra.mxu0 0.0
        %548 = vmatpush.msra.mxu0 0.0
        %549 = vmatpush.msra.mxu0 0.0
        %550 = vmatpush.msra.mxu0 0.0
        %551 = vmatpush.msra.mxu0 0.0
        %552 = vmatpush.msra.mxu0 0.0
        %553 = vmatpush.msra.mxu0 0.0
        %554 = vmatpush.msra.mxu0 0.0
        %555 = vmatpush.msra.mxu0 0.0
        %556 = vmatpush.msra.mxu0 %v409
        %557 = vmatpush.msra.mxu0 %v405
        %558 = vmatmul.f32.gmra.mxu0 %v444
        %v559 = vpop.f32.mrf.mxu0
        %v560 = vadd.f32 %v425, %v559
        %561 = vmatmul.f32.gmra.mxu0 %v447
        %v562 = vpop.f32.mrf.mxu0
        %v563 = vadd.f32 %v430, %v562
        %564 = vmatmul.f32.gmra.mxu0 %v450
        %v565 = vpop.f32.mrf.mxu0
        %v566 = vadd.f32 %v435, %v565
        %567 = vmatmul.f32.gmra.mxu0 %v453
        %v568 = vpop.f32.mrf.mxu0
        %v569 = vadd.f32 %v440, %v568
        %570 = vdwg.mxu0
        %v571 = vmax.f32 %v473, 0.0
        %v572 = vmax.f32 %v502, 0.0
        %v573 = vmax.f32 %v531, 0.0
        %v574 = vmax.f32 %v560, 0.0
        %v575 = vmax.f32 %v476, 0.0
        %v576 = vmax.f32 %v505, 0.0
        %v577 = vmax.f32 %v534, 0.0
        %v578 = vmax.f32 %v563, 0.0
        %v579 = vmax.f32 %v479, 0.0
        %v580 = vmax.f32 %v508, 0.0
        %v581 = vmax.f32 %v537, 0.0
        %v582 = vmax.f32 %v566, 0.0
        %v583 = vmax.f32 %v482, 0.0
        %v584 = vmax.f32 %v511, 0.0
        %v585 = vmax.f32 %v540, 0.0
        %v586 = vmax.f32 %v569, 0.0
        %v587 = vld [vmem:[%s2] sm:$0xff]
        %v588 = vld [vmem:[%s2 + $0x8] sm:$0xff]
        %v589 = vld [vmem:[%s2 + $0x10] sm:$0xff]
        %v590 = vld [vmem:[%s2 + $0x18] sm:$0xff]
        %v591 = vld [vmem:[%s9 + $0x20] sm:$0xff]
        %v592 = vld [vmem:[%s9 + $0x28] sm:$0xff]
        %v593 = vld [vmem:[%s9 + $0x30] sm:$0xff]
        %v594 = vld [vmem:[%s9 + $0x38] sm:$0xff]
        %596 = vset.pattern.permute.xlu0 0
        %597 = vperm.xlu0 %596, %v591
        %v598 = vpop.permute.xlu0 %597
        %601 = vset.pattern.permute.xlu0 0
        %602 = vperm.xlu0 %601, %v592
        %v603 = vpop.permute.xlu0 %602
        %606 = vset.pattern.permute.xlu0 0
        %607 = vperm.xlu0 %606, %v593
        %v608 = vpop.permute.xlu0 %607
        %611 = vset.pattern.permute.xlu0 0
        %612 = vperm.xlu0 %611, %v594
        %v613 = vpop.permute.xlu0 %612
        %vm615 = vcmask 261120
        %v617 = vsel %vm615, %v587, 0
        %v620 = vsel %vm615, %v588, 0
        %v623 = vsel %vm615, %v589, 0
        %v626 = vsel %vm615, %v590, 0
        %628 = vmatpush.msra.mxu0 0.0
        %629 = vmatpush.msra.mxu0 0.0
        %630 = vmatpush.msra.mxu0 0.0
        %631 = vmatpush.msra.mxu0 0.0
        %632 = vmatpush.msra.mxu0 0.0
        %633 = vmatpush.msra.mxu0 0.0
        %634 = vmatpush.msra.mxu0 0.0
        %635 = vmatpush.msra.mxu0 0.0
        %636 = vmatpush.msra.mxu0 0.0
        %637 = vmatpush.msra.mxu0 0.0
        %638 = vmatpush.msra.mxu0 0.0
        %639 = vmatpush.msra.mxu0 0.0
        %640 = vmatpush.msra.mxu0 %v583
        %641 = vmatpush.msra.mxu0 %v579
        %642 = vmatpush.msra.mxu0 %v575
        %643 = vmatpush.msra.mxu0 %v571
        %644 = vmatmul.f32.gmra.mxu0 %v617
        %v645 = vpop.f32.mrf.mxu0
        %v646 = vadd.f32 %v598, %v645
        %647 = vmatmul.f32.gmra.mxu0 %v620
        %v648 = vpop.f32.mrf.mxu0
        %v649 = vadd.f32 %v603, %v648
        %650 = vmatmul.f32.gmra.mxu0 %v623
        %v651 = vpop.f32.mrf.mxu0
        %v652 = vadd.f32 %v608, %v651
        %653 = vmatmul.f32.gmra.mxu0 %v626
        %v654 = vpop.f32.mrf.mxu0
        %v655 = vadd.f32 %v613, %v654
        %656 = vdwg.mxu0
        %657 = vmatpush.msra.mxu0 0.0
        %658 = vmatpush.msra.mxu0 0.0
        %659 = vmatpush.msra.mxu0 0.0
        %660 = vmatpush.msra.mxu0 0.0
        %661 = vmatpush.msra.mxu0 0.0
        %662 = vmatpush.msra.mxu0 0.0
        %663 = vmatpush.msra.mxu0 0.0
        %664 = vmatpush.msra.mxu0 0.0
        %665 = vmatpush.msra.mxu0 0.0
        %666 = vmatpush.msra.mxu0 0.0
        %667 = vmatpush.msra.mxu0 0.0
        %668 = vmatpush.msra.mxu0 0.0
        %669 = vmatpush.msra.mxu0 %v584
        %670 = vmatpush.msra.mxu0 %v580
        %671 = vmatpush.msra.mxu0 %v576
        %672 = vmatpush.msra.mxu0 %v572
        %673 = vmatmul.f32.gmra.mxu0 %v617
        %v674 = vpop.f32.mrf.mxu0
        %v675 = vadd.f32 %v598, %v674
        %676 = vmatmul.f32.gmra.mxu0 %v620
        %v677 = vpop.f32.mrf.mxu0
        %v678 = vadd.f32 %v603, %v677
        %679 = vmatmul.f32.gmra.mxu0 %v623
        %v680 = vpop.f32.mrf.mxu0
        %v681 = vadd.f32 %v608, %v680
        %682 = vmatmul.f32.gmra.mxu0 %v626
        %v683 = vpop.f32.mrf.mxu0
        %v684 = vadd.f32 %v613, %v683
        %685 = vdwg.mxu0
        %686 = vmatpush.msra.mxu0 0.0
        %687 = vmatpush.msra.mxu0 0.0
        %688 = vmatpush.msra.mxu0 0.0
        %689 = vmatpush.msra.mxu0 0.0
        %690 = vmatpush.msra.mxu0 0.0
        %691 = vmatpush.msra.mxu0 0.0
        %692 = vmatpush.msra.mxu0 0.0
        %693 = vmatpush.msra.mxu0 0.0
        %694 = vmatpush.msra.mxu0 0.0
        %695 = vmatpush.msra.mxu0 0.0
        %696 = vmatpush.msra.mxu0 0.0
        %697 = vmatpush.msra.mxu0 0.0
        %698 = vmatpush.msra.mxu0 %v585
        %699 = vmatpush.msra.mxu0 %v581
        %700 = vmatpush.msra.mxu0 %v577
        %701 = vmatpush.msra.mxu0 %v573
        %702 = vmatmul.f32.gmra.mxu0 %v617
        %v703 = vpop.f32.mrf.mxu0
        %v704 = vadd.f32 %v598, %v703
        %705 = vmatmul.f32.gmra.mxu0 %v620
        %v706 = vpop.f32.mrf.mxu0
        %v707 = vadd.f32 %v603, %v706
        %708 = vmatmul.f32.gmra.mxu0 %v623
        %v709 = vpop.f32.mrf.mxu0
        %v710 = vadd.f32 %v608, %v709
        %711 = vmatmul.f32.gmra.mxu0 %v626
        %v712 = vpop.f32.mrf.mxu0
        %v713 = vadd.f32 %v613, %v712
        %714 = vdwg.mxu0
        %715 = vmatpush.msra.mxu0 0.0
        %716 = vmatpush.msra.mxu0 0.0
        %717 = vmatpush.msra.mxu0 0.0
        %718 = vmatpush.msra.mxu0 0.0
        %719 = vmatpush.msra.mxu0 0.0
        %720 = vmatpush.msra.mxu0 0.0
        %721 = vmatpush.msra.mxu0 0.0
        %722 = vmatpush.msra.mxu0 0.0
        %723 = vmatpush.msra.mxu0 0.0
        %724 = vmatpush.msra.mxu0 0.0
        %725 = vmatpush.msra.mxu0 0.0
        %726 = vmatpush.msra.mxu0 0.0
        %727 = vmatpush.msra.mxu0 %v586
        %728 = vmatpush.msra.mxu0 %v582
        %729 = vmatpush.msra.mxu0 %v578
        %730 = vmatpush.msra.mxu0 %v574
        %731 = vmatmul.f32.gmra.mxu0 %v617
        %v732 = vpop.f32.mrf.mxu0
        %v733 = vadd.f32 %v598, %v732
        %734 = vmatmul.f32.gmra.mxu0 %v620
        %v735 = vpop.f32.mrf.mxu0
        %v736 = vadd.f32 %v603, %v735
        %737 = vmatmul.f32.gmra.mxu0 %v623
        %v738 = vpop.f32.mrf.mxu0
        %v739 = vadd.f32 %v608, %v738
        %740 = vmatmul.f32.gmra.mxu0 %v626
        %v741 = vpop.f32.mrf.mxu0
        %v742 = vadd.f32 %v613, %v741
        %743 = vdwg.mxu0
        %v744 = vmax.f32 %v646, 0.0
        %v745 = vmax.f32 %v675, 0.0
        %v746 = vmax.f32 %v704, 0.0
        %v747 = vmax.f32 %v733, 0.0
        %v748 = vmax.f32 %v649, 0.0
        %v749 = vmax.f32 %v678, 0.0
        %v750 = vmax.f32 %v707, 0.0
        %v751 = vmax.f32 %v736, 0.0
        %v752 = vmax.f32 %v652, 0.0
        %v753 = vmax.f32 %v681, 0.0
        %v754 = vmax.f32 %v710, 0.0
        %v755 = vmax.f32 %v739, 0.0
        %v756 = vmax.f32 %v655, 0.0
        %v757 = vmax.f32 %v684, 0.0
        %v758 = vmax.f32 %v713, 0.0
        %v759 = vmax.f32 %v742, 0.0
        %s760 = scalar_lea.vmem %s2, 32
        %v761 = vld [vmem:[%s760] sm:$0xff]
        %v762 = vld [vmem:[%s760 + $0x8] sm:$0xff]
        %v763 = vld [vmem:[%s760 + $0x10] sm:$0xff]
        %v764 = vld [vmem:[%s760 + $0x18] sm:$0xff]
        %v765 = vld [vmem:[%s9 + $0x40] sm:$0xff]
        %v766 = vld [vmem:[%s9 + $0x48] sm:$0xff]
        %v767 = vld [vmem:[%s9 + $0x50] sm:$0xff]
        %v768 = vld [vmem:[%s9 + $0x58] sm:$0xff]
        %770 = vset.pattern.permute.xlu0 0
        %771 = vperm.xlu0 %770, %v765
        %v772 = vpop.permute.xlu0 %771
        %775 = vset.pattern.permute.xlu0 0
        %776 = vperm.xlu0 %775, %v766
        %v777 = vpop.permute.xlu0 %776
        %780 = vset.pattern.permute.xlu0 0
        %781 = vperm.xlu0 %780, %v767
        %v782 = vpop.permute.xlu0 %781
        %785 = vset.pattern.permute.xlu0 0
        %786 = vperm.xlu0 %785, %v768
        %v787 = vpop.permute.xlu0 %786
        %v790 = vsel %vm615, %v761, 0
        %v793 = vsel %vm615, %v762, 0
        %v796 = vsel %vm615, %v763, 0
        %v799 = vsel %vm615, %v764, 0
        %801 = vmatpush.msra.mxu0 0.0
        %802 = vmatpush.msra.mxu0 0.0
        %803 = vmatpush.msra.mxu0 0.0
        %804 = vmatpush.msra.mxu0 0.0
        %805 = vmatpush.msra.mxu0 0.0
        %806 = vmatpush.msra.mxu0 0.0
        %807 = vmatpush.msra.mxu0 0.0
        %808 = vmatpush.msra.mxu0 0.0
        %809 = vmatpush.msra.mxu0 0.0
        %810 = vmatpush.msra.mxu0 0.0
        %811 = vmatpush.msra.mxu0 0.0
        %812 = vmatpush.msra.mxu0 0.0
        %813 = vmatpush.msra.mxu0 %v756
        %814 = vmatpush.msra.mxu0 %v752
        %815 = vmatpush.msra.mxu0 %v748
        %816 = vmatpush.msra.mxu0 %v744
        %817 = vmatmul.f32.gmra.mxu0 %v790
        %v818 = vpop.f32.mrf.mxu0
        %v819 = vadd.f32 %v772, %v818
        %820 = vmatmul.f32.gmra.mxu0 %v793
        %v821 = vpop.f32.mrf.mxu0
        %v822 = vadd.f32 %v777, %v821
        %823 = vmatmul.f32.gmra.mxu0 %v796
        %v824 = vpop.f32.mrf.mxu0
        %v825 = vadd.f32 %v782, %v824
        %826 = vmatmul.f32.gmra.mxu0 %v799
        %v827 = vpop.f32.mrf.mxu0
        %v828 = vadd.f32 %v787, %v827
        %829 = vdwg.mxu0
        %830 = vmatpush.msra.mxu0 0.0
        %831 = vmatpush.msra.mxu0 0.0
        %832 = vmatpush.msra.mxu0 0.0
        %833 = vmatpush.msra.mxu0 0.0
        %834 = vmatpush.msra.mxu0 0.0
        %835 = vmatpush.msra.mxu0 0.0
        %836 = vmatpush.msra.mxu0 0.0
        %837 = vmatpush.msra.mxu0 0.0
        %838 = vmatpush.msra.mxu0 0.0
        %839 = vmatpush.msra.mxu0 0.0
        %840 = vmatpush.msra.mxu0 0.0
        %841 = vmatpush.msra.mxu0 0.0
        %842 = vmatpush.msra.mxu0 %v757
        %843 = vmatpush.msra.mxu0 %v753
        %844 = vmatpush.msra.mxu0 %v749
        %845 = vmatpush.msra.mxu0 %v745
        %846 = vmatmul.f32.gmra.mxu0 %v790
        %v847 = vpop.f32.mrf.mxu0
        %v848 = vadd.f32 %v772, %v847
        %849 = vmatmul.f32.gmra.mxu0 %v793
        %v850 = vpop.f32.mrf.mxu0
        %v851 = vadd.f32 %v777, %v850
        %852 = vmatmul.f32.gmra.mxu0 %v796
        %v853 = vpop.f32.mrf.mxu0
        %v854 = vadd.f32 %v782, %v853
        %855 = vmatmul.f32.gmra.mxu0 %v799
        %v856 = vpop.f32.mrf.mxu0
        %v857 = vadd.f32 %v787, %v856
        %858 = vdwg.mxu0
        %859 = vmatpush.msra.mxu0 0.0
        %860 = vmatpush.msra.mxu0 0.0
        %861 = vmatpush.msra.mxu0 0.0
        %862 = vmatpush.msra.mxu0 0.0
        %863 = vmatpush.msra.mxu0 0.0
        %864 = vmatpush.msra.mxu0 0.0
        %865 = vmatpush.msra.mxu0 0.0
        %866 = vmatpush.msra.mxu0 0.0
        %867 = vmatpush.msra.mxu0 0.0
        %868 = vmatpush.msra.mxu0 0.0
        %869 = vmatpush.msra.mxu0 0.0
        %870 = vmatpush.msra.mxu0 0.0
        %871 = vmatpush.msra.mxu0 %v758
        %872 = vmatpush.msra.mxu0 %v754
        %873 = vmatpush.msra.mxu0 %v750
        %874 = vmatpush.msra.mxu0 %v746
        %875 = vmatmul.f32.gmra.mxu0 %v790
        %v876 = vpop.f32.mrf.mxu0
        %v877 = vadd.f32 %v772, %v876
        %878 = vmatmul.f32.gmra.mxu0 %v793
        %v879 = vpop.f32.mrf.mxu0
        %v880 = vadd.f32 %v777, %v879
        %881 = vmatmul.f32.gmra.mxu0 %v796
        %v882 = vpop.f32.mrf.mxu0
        %v883 = vadd.f32 %v782, %v882
        %884 = vmatmul.f32.gmra.mxu0 %v799
        %v885 = vpop.f32.mrf.mxu0
        %v886 = vadd.f32 %v787, %v885
        %887 = vdwg.mxu0
        %888 = vmatpush.msra.mxu0 0.0
        %889 = vmatpush.msra.mxu0 0.0
        %890 = vmatpush.msra.mxu0 0.0
        %891 = vmatpush.msra.mxu0 0.0
        %892 = vmatpush.msra.mxu0 0.0
        %893 = vmatpush.msra.mxu0 0.0
        %894 = vmatpush.msra.mxu0 0.0
        %895 = vmatpush.msra.mxu0 0.0
        %896 = vmatpush.msra.mxu0 0.0
        %897 = vmatpush.msra.mxu0 0.0
        %898 = vmatpush.msra.mxu0 0.0
        %899 = vmatpush.msra.mxu0 0.0
        %900 = vmatpush.msra.mxu0 %v759
        %901 = vmatpush.msra.mxu0 %v755
        %902 = vmatpush.msra.mxu0 %v751
        %903 = vmatpush.msra.mxu0 %v747
        %904 = vmatmul.f32.gmra.mxu0 %v790
        %v905 = vpop.f32.mrf.mxu0
        %v906 = vadd.f32 %v772, %v905
        %907 = vmatmul.f32.gmra.mxu0 %v793
        %v908 = vpop.f32.mrf.mxu0
        %v909 = vadd.f32 %v777, %v908
        %910 = vmatmul.f32.gmra.mxu0 %v796
        %v911 = vpop.f32.mrf.mxu0
        %v912 = vadd.f32 %v782, %v911
        %913 = vmatmul.f32.gmra.mxu0 %v799
        %v914 = vpop.f32.mrf.mxu0
        %v915 = vadd.f32 %v787, %v914
        %916 = vdwg.mxu0
        %v917 = vmax.f32 %v819, 0.0
        %v918 = vmax.f32 %v848, 0.0
        %v919 = vmax.f32 %v877, 0.0
        %v920 = vmax.f32 %v906, 0.0
        %v921 = vmax.f32 %v822, 0.0
        %v922 = vmax.f32 %v851, 0.0
        %v923 = vmax.f32 %v880, 0.0
        %v924 = vmax.f32 %v909, 0.0
        %v925 = vmax.f32 %v825, 0.0
        %v926 = vmax.f32 %v854, 0.0
        %v927 = vmax.f32 %v883, 0.0
        %v928 = vmax.f32 %v912, 0.0
        %v929 = vmax.f32 %v828, 0.0
        %v930 = vmax.f32 %v857, 0.0
        %v931 = vmax.f32 %v886, 0.0
        %v932 = vmax.f32 %v915, 0.0
        %s933 = scalar_lea.vmem %s2, 64
        %v934 = vld [vmem:[%s933] sm:$0xff]
        %v935 = vld [vmem:[%s933 + $0x8] sm:$0xff]
        %v936 = vld [vmem:[%s933 + $0x10] sm:$0xff]
        %v937 = vld [vmem:[%s933 + $0x18] sm:$0xff]
        %v938 = vld [vmem:[%s9 + $0x60] sm:$0xff]
        %v939 = vld [vmem:[%s9 + $0x68] sm:$0xff]
        %v940 = vld [vmem:[%s9 + $0x70] sm:$0xff]
        %v941 = vld [vmem:[%s9 + $0x78] sm:$0xff]
        %943 = vset.pattern.permute.xlu0 0
        %944 = vperm.xlu0 %943, %v938
        %v945 = vpop.permute.xlu0 %944
        %948 = vset.pattern.permute.xlu0 0
        %949 = vperm.xlu0 %948, %v939
        %v950 = vpop.permute.xlu0 %949
        %953 = vset.pattern.permute.xlu0 0
        %954 = vperm.xlu0 %953, %v940
        %v955 = vpop.permute.xlu0 %954
        %958 = vset.pattern.permute.xlu0 0
        %959 = vperm.xlu0 %958, %v941
        %v960 = vpop.permute.xlu0 %959
        %v963 = vsel %vm615, %v934, 0
        %v966 = vsel %vm615, %v935, 0
        %v969 = vsel %vm615, %v936, 0
        %v972 = vsel %vm615, %v937, 0
        %974 = vmatpush.msra.mxu0 0.0
        %975 = vmatpush.msra.mxu0 0.0
        %976 = vmatpush.msra.mxu0 0.0
        %977 = vmatpush.msra.mxu0 0.0
        %978 = vmatpush.msra.mxu0 0.0
        %979 = vmatpush.msra.mxu0 0.0
        %980 = vmatpush.msra.mxu0 0.0
        %981 = vmatpush.msra.mxu0 0.0
        %982 = vmatpush.msra.mxu0 0.0
        %983 = vmatpush.msra.mxu0 0.0
        %984 = vmatpush.msra.mxu0 0.0
        %985 = vmatpush.msra.mxu0 0.0
        %986 = vmatpush.msra.mxu0 %v929
        %987 = vmatpush.msra.mxu0 %v925
        %988 = vmatpush.msra.mxu0 %v921
        %989 = vmatpush.msra.mxu0 %v917
        %990 = vmatmul.f32.gmra.mxu0 %v963
        %v991 = vpop.f32.mrf.mxu0
        %v992 = vadd.f32 %v945, %v991
        %993 = vmatmul.f32.gmra.mxu0 %v966
        %v994 = vpop.f32.mrf.mxu0
        %v995 = vadd.f32 %v950, %v994
        %996 = vmatmul.f32.gmra.mxu0 %v969
        %v997 = vpop.f32.mrf.mxu0
        %v998 = vadd.f32 %v955, %v997
        %999 = vmatmul.f32.gmra.mxu0 %v972
        %v1000 = vpop.f32.mrf.mxu0
        %v1001 = vadd.f32 %v960, %v1000
        %1002 = vdwg.mxu0
        %1003 = vmatpush.msra.mxu0 0.0
        %1004 = vmatpush.msra.mxu0 0.0
        %1005 = vmatpush.msra.mxu0 0.0
        %1006 = vmatpush.msra.mxu0 0.0
        %1007 = vmatpush.msra.mxu0 0.0
        %1008 = vmatpush.msra.mxu0 0.0
        %1009 = vmatpush.msra.mxu0 0.0
        %1010 = vmatpush.msra.mxu0 0.0
        %1011 = vmatpush.msra.mxu0 0.0
        %1012 = vmatpush.msra.mxu0 0.0
        %1013 = vmatpush.msra.mxu0 0.0
        %1014 = vmatpush.msra.mxu0 0.0
        %1015 = vmatpush.msra.mxu0 %v930
        %1016 = vmatpush.msra.mxu0 %v926
        %1017 = vmatpush.msra.mxu0 %v922
        %1018 = vmatpush.msra.mxu0 %v918
        %1019 = vmatmul.f32.gmra.mxu0 %v963
        %v1020 = vpop.f32.mrf.mxu0
        %v1021 = vadd.f32 %v945, %v1020
        %1022 = vmatmul.f32.gmra.mxu0 %v966
        %v1023 = vpop.f32.mrf.mxu0
        %v1024 = vadd.f32 %v950, %v1023
        %1025 = vmatmul.f32.gmra.mxu0 %v969
        %v1026 = vpop.f32.mrf.mxu0
        %v1027 = vadd.f32 %v955, %v1026
        %1028 = vmatmul.f32.gmra.mxu0 %v972
        %v1029 = vpop.f32.mrf.mxu0
        %v1030 = vadd.f32 %v960, %v1029
        %1031 = vdwg.mxu0
        %1032 = vmatpush.msra.mxu0 0.0
        %1033 = vmatpush.msra.mxu0 0.0
        %1034 = vmatpush.msra.mxu0 0.0
        %1035 = vmatpush.msra.mxu0 0.0
        %1036 = vmatpush.msra.mxu0 0.0
        %1037 = vmatpush.msra.mxu0 0.0
        %1038 = vmatpush.msra.mxu0 0.0
        %1039 = vmatpush.msra.mxu0 0.0
        %1040 = vmatpush.msra.mxu0 0.0
        %1041 = vmatpush.msra.mxu0 0.0
        %1042 = vmatpush.msra.mxu0 0.0
        %1043 = vmatpush.msra.mxu0 0.0
        %1044 = vmatpush.msra.mxu0 %v931
        %1045 = vmatpush.msra.mxu0 %v927
        %1046 = vmatpush.msra.mxu0 %v923
        %1047 = vmatpush.msra.mxu0 %v919
        %1048 = vmatmul.f32.gmra.mxu0 %v963
        %v1049 = vpop.f32.mrf.mxu0
        %v1050 = vadd.f32 %v945, %v1049
        %1051 = vmatmul.f32.gmra.mxu0 %v966
        %v1052 = vpop.f32.mrf.mxu0
        %v1053 = vadd.f32 %v950, %v1052
        %1054 = vmatmul.f32.gmra.mxu0 %v969
        %v1055 = vpop.f32.mrf.mxu0
        %v1056 = vadd.f32 %v955, %v1055
        %1057 = vmatmul.f32.gmra.mxu0 %v972
        %v1058 = vpop.f32.mrf.mxu0
        %v1059 = vadd.f32 %v960, %v1058
        %1060 = vdwg.mxu0
        %1061 = vmatpush.msra.mxu0 0.0
        %1062 = vmatpush.msra.mxu0 0.0
        %1063 = vmatpush.msra.mxu0 0.0
        %1064 = vmatpush.msra.mxu0 0.0
        %1065 = vmatpush.msra.mxu0 0.0
        %1066 = vmatpush.msra.mxu0 0.0
        %1067 = vmatpush.msra.mxu0 0.0
        %1068 = vmatpush.msra.mxu0 0.0
        %1069 = vmatpush.msra.mxu0 0.0
        %1070 = vmatpush.msra.mxu0 0.0
        %1071 = vmatpush.msra.mxu0 0.0
        %1072 = vmatpush.msra.mxu0 0.0
        %1073 = vmatpush.msra.mxu0 %v932
        %1074 = vmatpush.msra.mxu0 %v928
        %1075 = vmatpush.msra.mxu0 %v924
        %1076 = vmatpush.msra.mxu0 %v920
        %1077 = vmatmul.f32.gmra.mxu0 %v963
        %v1078 = vpop.f32.mrf.mxu0
        %v1079 = vadd.f32 %v945, %v1078
        %1080 = vmatmul.f32.gmra.mxu0 %v966
        %v1081 = vpop.f32.mrf.mxu0
        %v1082 = vadd.f32 %v950, %v1081
        %1083 = vmatmul.f32.gmra.mxu0 %v969
        %v1084 = vpop.f32.mrf.mxu0
        %v1085 = vadd.f32 %v955, %v1084
        %1086 = vmatmul.f32.gmra.mxu0 %v972
        %v1087 = vpop.f32.mrf.mxu0
        %v1088 = vadd.f32 %v960, %v1087
        %1089 = vdwg.mxu0
        %v1090 = vmax.f32 %v992, 0.0
        %v1091 = vmax.f32 %v1021, 0.0
        %v1092 = vmax.f32 %v1050, 0.0
        %v1093 = vmax.f32 %v1079, 0.0
        %v1094 = vmax.f32 %v995, 0.0
        %v1095 = vmax.f32 %v1024, 0.0
        %v1096 = vmax.f32 %v1053, 0.0
        %v1097 = vmax.f32 %v1082, 0.0
        %v1098 = vmax.f32 %v998, 0.0
        %v1099 = vmax.f32 %v1027, 0.0
        %v1100 = vmax.f32 %v1056, 0.0
        %v1101 = vmax.f32 %v1085, 0.0
        %v1102 = vmax.f32 %v1001, 0.0
        %v1103 = vmax.f32 %v1030, 0.0
        %v1104 = vmax.f32 %v1059, 0.0
        %v1105 = vmax.f32 %v1088, 0.0
        %s1106 = scalar_lea.vmem %s2, 96
        %v1107 = vld [vmem:[%s1106] sm:$0xff]
        %v1108 = vld [vmem:[%s1106 + $0x8] sm:$0xff]
        %v1109 = vld [vmem:[%s1106 + $0x10] sm:$0xff]
        %v1110 = vld [vmem:[%s1106 + $0x18] sm:$0xff]
        %v1111 = vld [vmem:[%s9 + $0x80] sm:$0xff]
        %v1112 = vld [vmem:[%s9 + $0x88] sm:$0xff]
        %v1113 = vld [vmem:[%s9 + $0x90] sm:$0xff]
        %v1114 = vld [vmem:[%s9 + $0x98] sm:$0xff]
        %1116 = vset.pattern.permute.xlu0 0
        %1117 = vperm.xlu0 %1116, %v1111
        %v1118 = vpop.permute.xlu0 %1117
        %1121 = vset.pattern.permute.xlu0 0
        %1122 = vperm.xlu0 %1121, %v1112
        %v1123 = vpop.permute.xlu0 %1122
        %1126 = vset.pattern.permute.xlu0 0
        %1127 = vperm.xlu0 %1126, %v1113
        %v1128 = vpop.permute.xlu0 %1127
        %1131 = vset.pattern.permute.xlu0 0
        %1132 = vperm.xlu0 %1131, %v1114
        %v1133 = vpop.permute.xlu0 %1132
        %v1136 = vsel %vm615, %v1107, 0
        %v1139 = vsel %vm615, %v1108, 0
        %v1142 = vsel %vm615, %v1109, 0
        %v1145 = vsel %vm615, %v1110, 0
        %1147 = vmatpush.msra.mxu0 0.0
        %1148 = vmatpush.msra.mxu0 0.0
        %1149 = vmatpush.msra.mxu0 0.0
        %1150 = vmatpush.msra.mxu0 0.0
        %1151 = vmatpush.msra.mxu0 0.0
        %1152 = vmatpush.msra.mxu0 0.0
        %1153 = vmatpush.msra.mxu0 0.0
        %1154 = vmatpush.msra.mxu0 0.0
        %1155 = vmatpush.msra.mxu0 0.0
        %1156 = vmatpush.msra.mxu0 0.0
        %1157 = vmatpush.msra.mxu0 0.0
        %1158 = vmatpush.msra.mxu0 0.0
        %1159 = vmatpush.msra.mxu0 %v1102
        %1160 = vmatpush.msra.mxu0 %v1098
        %1161 = vmatpush.msra.mxu0 %v1094
        %1162 = vmatpush.msra.mxu0 %v1090
        %1163 = vmatmul.f32.gmra.mxu0 %v1136
        %v1164 = vpop.f32.mrf.mxu0
        %v1165 = vadd.f32 %v1118, %v1164
        %1166 = vmatmul.f32.gmra.mxu0 %v1139
        %v1167 = vpop.f32.mrf.mxu0
        %v1168 = vadd.f32 %v1123, %v1167
        %1169 = vmatmul.f32.gmra.mxu0 %v1142
        %v1170 = vpop.f32.mrf.mxu0
        %v1171 = vadd.f32 %v1128, %v1170
        %1172 = vmatmul.f32.gmra.mxu0 %v1145
        %v1173 = vpop.f32.mrf.mxu0
        %v1174 = vadd.f32 %v1133, %v1173
        %1175 = vdwg.mxu0
        %1176 = vmatpush.msra.mxu0 0.0
        %1177 = vmatpush.msra.mxu0 0.0
        %1178 = vmatpush.msra.mxu0 0.0
        %1179 = vmatpush.msra.mxu0 0.0
        %1180 = vmatpush.msra.mxu0 0.0
        %1181 = vmatpush.msra.mxu0 0.0
        %1182 = vmatpush.msra.mxu0 0.0
        %1183 = vmatpush.msra.mxu0 0.0
        %1184 = vmatpush.msra.mxu0 0.0
        %1185 = vmatpush.msra.mxu0 0.0
        %1186 = vmatpush.msra.mxu0 0.0
        %1187 = vmatpush.msra.mxu0 0.0
        %1188 = vmatpush.msra.mxu0 %v1103
        %1189 = vmatpush.msra.mxu0 %v1099
        %1190 = vmatpush.msra.mxu0 %v1095
        %1191 = vmatpush.msra.mxu0 %v1091
        %1192 = vmatmul.f32.gmra.mxu0 %v1136
        %v1193 = vpop.f32.mrf.mxu0
        %v1194 = vadd.f32 %v1118, %v1193
        %1195 = vmatmul.f32.gmra.mxu0 %v1139
        %v1196 = vpop.f32.mrf.mxu0
        %v1197 = vadd.f32 %v1123, %v1196
        %1198 = vmatmul.f32.gmra.mxu0 %v1142
        %v1199 = vpop.f32.mrf.mxu0
        %v1200 = vadd.f32 %v1128, %v1199
        %1201 = vmatmul.f32.gmra.mxu0 %v1145
        %v1202 = vpop.f32.mrf.mxu0
        %v1203 = vadd.f32 %v1133, %v1202
        %1204 = vdwg.mxu0
        %1205 = vmatpush.msra.mxu0 0.0
        %1206 = vmatpush.msra.mxu0 0.0
        %1207 = vmatpush.msra.mxu0 0.0
        %1208 = vmatpush.msra.mxu0 0.0
        %1209 = vmatpush.msra.mxu0 0.0
        %1210 = vmatpush.msra.mxu0 0.0
        %1211 = vmatpush.msra.mxu0 0.0
        %1212 = vmatpush.msra.mxu0 0.0
        %1213 = vmatpush.msra.mxu0 0.0
        %1214 = vmatpush.msra.mxu0 0.0
        %1215 = vmatpush.msra.mxu0 0.0
        %1216 = vmatpush.msra.mxu0 0.0
        %1217 = vmatpush.msra.mxu0 %v1104
        %1218 = vmatpush.msra.mxu0 %v1100
        %1219 = vmatpush.msra.mxu0 %v1096
        %1220 = vmatpush.msra.mxu0 %v1092
        %1221 = vmatmul.f32.gmra.mxu0 %v1136
        %v1222 = vpop.f32.mrf.mxu0
        %v1223 = vadd.f32 %v1118, %v1222
        %1224 = vmatmul.f32.gmra.mxu0 %v1139
        %v1225 = vpop.f32.mrf.mxu0
        %v1226 = vadd.f32 %v1123, %v1225
        %1227 = vmatmul.f32.gmra.mxu0 %v1142
        %v1228 = vpop.f32.mrf.mxu0
        %v1229 = vadd.f32 %v1128, %v1228
        %1230 = vmatmul.f32.gmra.mxu0 %v1145
        %v1231 = vpop.f32.mrf.mxu0
        %v1232 = vadd.f32 %v1133, %v1231
        %1233 = vdwg.mxu0
        %1234 = vmatpush.msra.mxu0 0.0
        %1235 = vmatpush.msra.mxu0 0.0
        %1236 = vmatpush.msra.mxu0 0.0
        %1237 = vmatpush.msra.mxu0 0.0
        %1238 = vmatpush.msra.mxu0 0.0
        %1239 = vmatpush.msra.mxu0 0.0
        %1240 = vmatpush.msra.mxu0 0.0
        %1241 = vmatpush.msra.mxu0 0.0
        %1242 = vmatpush.msra.mxu0 0.0
        %1243 = vmatpush.msra.mxu0 0.0
        %1244 = vmatpush.msra.mxu0 0.0
        %1245 = vmatpush.msra.mxu0 0.0
        %1246 = vmatpush.msra.mxu0 %v1105
        %1247 = vmatpush.msra.mxu0 %v1101
        %1248 = vmatpush.msra.mxu0 %v1097
        %1249 = vmatpush.msra.mxu0 %v1093
        %1250 = vmatmul.f32.gmra.mxu0 %v1136
        %v1251 = vpop.f32.mrf.mxu0
        %v1252 = vadd.f32 %v1118, %v1251
        %1253 = vmatmul.f32.gmra.mxu0 %v1139
        %v1254 = vpop.f32.mrf.mxu0
        %v1255 = vadd.f32 %v1123, %v1254
        %1256 = vmatmul.f32.gmra.mxu0 %v1142
        %v1257 = vpop.f32.mrf.mxu0
        %v1258 = vadd.f32 %v1128, %v1257
        %1259 = vmatmul.f32.gmra.mxu0 %v1145
        %v1260 = vpop.f32.mrf.mxu0
        %v1261 = vadd.f32 %v1133, %v1260
        %1262 = vdwg.mxu0
        %v1263 = vmax.f32 %v1165, 0.0
        %v1264 = vmax.f32 %v1194, 0.0
        %v1265 = vmax.f32 %v1223, 0.0
        %v1266 = vmax.f32 %v1252, 0.0
        %v1267 = vmax.f32 %v1168, 0.0
        %v1268 = vmax.f32 %v1197, 0.0
        %v1269 = vmax.f32 %v1226, 0.0
        %v1270 = vmax.f32 %v1255, 0.0
        %v1271 = vmax.f32 %v1171, 0.0
        %v1272 = vmax.f32 %v1200, 0.0
        %v1273 = vmax.f32 %v1229, 0.0
        %v1274 = vmax.f32 %v1258, 0.0
        %v1275 = vmax.f32 %v1174, 0.0
        %v1276 = vmax.f32 %v1203, 0.0
        %v1277 = vmax.f32 %v1232, 0.0
        %v1278 = vmax.f32 %v1261, 0.0
        %v1279 = vld [vmem:[%s3] sm:$0xff]
        %v1280 = vld [vmem:[%s3 + $0x8] sm:$0xff]
        %v1281 = vld [vmem:[%s3 + $0x10] sm:$0xff]
        %v1282 = vld [vmem:[%s3 + $0x18] sm:$0xff]
        %v1283 = vld [vmem:[%s4] sm:$0xff]
        %v1284 = vld [vmem:[%s4 + $0x8] sm:$0xff]
        %v1285 = vld [vmem:[%s4 + $0x10] sm:$0xff]
        %v1286 = vld [vmem:[%s4 + $0x18] sm:$0xff]
        %v1288 = vsel %vm615, %v1283, 0
        %v1291 = vsel %vm615, %v1284, 0
        %v1294 = vsel %vm615, %v1285, 0
        %v1297 = vsel %vm615, %v1286, 0
        %1299 = vmatpush.msra.mxu0 0.0
        %1300 = vmatpush.msra.mxu0 0.0
        %1301 = vmatpush.msra.mxu0 0.0
        %1302 = vmatpush.msra.mxu0 0.0
        %1303 = vmatpush.msra.mxu0 0.0
        %1304 = vmatpush.msra.mxu0 0.0
        %1305 = vmatpush.msra.mxu0 0.0
        %1306 = vmatpush.msra.mxu0 0.0
        %1307 = vmatpush.msra.mxu0 0.0
        %1308 = vmatpush.msra.mxu0 0.0
        %1309 = vmatpush.msra.mxu0 0.0
        %1310 = vmatpush.msra.mxu0 0.0
        %1311 = vmatpush.msra.mxu0 %v1275
        %1312 = vmatpush.msra.mxu0 %v1271
        %1313 = vmatpush.msra.mxu0 %v1267
        %1314 = vmatpush.msra.mxu0 %v1263
        %1315 = vmatmul.f32.gmra.mxu0 %v1288
        %v1316 = vpop.f32.mrf.mxu0
        %v1317 = vadd.f32 0.0, %v1316
        %1318 = vmatmul.f32.gmra.mxu0 %v1291
        %v1319 = vpop.f32.mrf.mxu0
        %v1320 = vadd.f32 0.0, %v1319
        %1321 = vmatmul.f32.gmra.mxu0 %v1294
        %v1322 = vpop.f32.mrf.mxu0
        %v1323 = vadd.f32 0.0, %v1322
        %1324 = vmatmul.f32.gmra.mxu0 %v1297
        %v1325 = vpop.f32.mrf.mxu0
        %v1326 = vadd.f32 0.0, %v1325
        %1327 = vdwg.mxu0
        %1328 = vmatpush.msra.mxu0 0.0
        %1329 = vmatpush.msra.mxu0 0.0
        %1330 = vmatpush.msra.mxu0 0.0
        %1331 = vmatpush.msra.mxu0 0.0
        %1332 = vmatpush.msra.mxu0 0.0
        %1333 = vmatpush.msra.mxu0 0.0
        %1334 = vmatpush.msra.mxu0 0.0
        %1335 = vmatpush.msra.mxu0 0.0
        %1336 = vmatpush.msra.mxu0 0.0
        %1337 = vmatpush.msra.mxu0 0.0
        %1338 = vmatpush.msra.mxu0 0.0
        %1339 = vmatpush.msra.mxu0 0.0
        %1340 = vmatpush.msra.mxu0 %v1276
        %1341 = vmatpush.msra.mxu0 %v1272
        %1342 = vmatpush.msra.mxu0 %v1268
        %1343 = vmatpush.msra.mxu0 %v1264
        %1344 = vmatmul.f32.gmra.mxu0 %v1288
        %v1345 = vpop.f32.mrf.mxu0
        %v1346 = vadd.f32 0.0, %v1345
        %1347 = vmatmul.f32.gmra.mxu0 %v1291
        %v1348 = vpop.f32.mrf.mxu0
        %v1349 = vadd.f32 0.0, %v1348
        %1350 = vmatmul.f32.gmra.mxu0 %v1294
        %v1351 = vpop.f32.mrf.mxu0
        %v1352 = vadd.f32 0.0, %v1351
        %1353 = vmatmul.f32.gmra.mxu0 %v1297
        %v1354 = vpop.f32.mrf.mxu0
        %v1355 = vadd.f32 0.0, %v1354
        %1356 = vdwg.mxu0
        %1357 = vmatpush.msra.mxu0 0.0
        %1358 = vmatpush.msra.mxu0 0.0
        %1359 = vmatpush.msra.mxu0 0.0
        %1360 = vmatpush.msra.mxu0 0.0
        %1361 = vmatpush.msra.mxu0 0.0
        %1362 = vmatpush.msra.mxu0 0.0
        %1363 = vmatpush.msra.mxu0 0.0
        %1364 = vmatpush.msra.mxu0 0.0
        %1365 = vmatpush.msra.mxu0 0.0
        %1366 = vmatpush.msra.mxu0 0.0
        %1367 = vmatpush.msra.mxu0 0.0
        %1368 = vmatpush.msra.mxu0 0.0
        %1369 = vmatpush.msra.mxu0 %v1277
        %1370 = vmatpush.msra.mxu0 %v1273
        %1371 = vmatpush.msra.mxu0 %v1269
        %1372 = vmatpush.msra.mxu0 %v1265
        %1373 = vmatmul.f32.gmra.mxu0 %v1288
        %v1374 = vpop.f32.mrf.mxu0
        %v1375 = vadd.f32 0.0, %v1374
        %1376 = vmatmul.f32.gmra.mxu0 %v1291
        %v1377 = vpop.f32.mrf.mxu0
        %v1378 = vadd.f32 0.0, %v1377
        %1379 = vmatmul.f32.gmra.mxu0 %v1294
        %v1380 = vpop.f32.mrf.mxu0
        %v1381 = vadd.f32 0.0, %v1380
        %1382 = vmatmul.f32.gmra.mxu0 %v1297
        %v1383 = vpop.f32.mrf.mxu0
        %v1384 = vadd.f32 0.0, %v1383
        %1385 = vdwg.mxu0
        %1386 = vmatpush.msra.mxu0 0.0
        %1387 = vmatpush.msra.mxu0 0.0
        %1388 = vmatpush.msra.mxu0 0.0
        %1389 = vmatpush.msra.mxu0 0.0
        %1390 = vmatpush.msra.mxu0 0.0
        %1391 = vmatpush.msra.mxu0 0.0
        %1392 = vmatpush.msra.mxu0 0.0
        %1393 = vmatpush.msra.mxu0 0.0
        %1394 = vmatpush.msra.mxu0 0.0
        %1395 = vmatpush.msra.mxu0 0.0
        %1396 = vmatpush.msra.mxu0 0.0
        %1397 = vmatpush.msra.mxu0 0.0
        %1398 = vmatpush.msra.mxu0 %v1278
        %1399 = vmatpush.msra.mxu0 %v1274
        %1400 = vmatpush.msra.mxu0 %v1270
        %1401 = vmatpush.msra.mxu0 %v1266
        %1402 = vmatmul.f32.gmra.mxu0 %v1288
        %v1403 = vpop.f32.mrf.mxu0
        %v1404 = vadd.f32 0.0, %v1403
        %1405 = vmatmul.f32.gmra.mxu0 %v1291
        %v1406 = vpop.f32.mrf.mxu0
        %v1407 = vadd.f32 0.0, %v1406
        %1408 = vmatmul.f32.gmra.mxu0 %v1294
        %v1409 = vpop.f32.mrf.mxu0
        %v1410 = vadd.f32 0.0, %v1409
        %1411 = vmatmul.f32.gmra.mxu0 %v1297
        %v1412 = vpop.f32.mrf.mxu0
        %v1413 = vadd.f32 0.0, %v1412
        %1414 = vdwg.mxu0
        %v1416 = vsel %vm442, %v1279, 0
        %v1419 = vsel %vm442, %v1280, 0
        %v1422 = vsel %vm442, %v1281, 0
        %v1425 = vsel %vm442, %v1282, 0
        %1427 = vmatpush.msra.mxu0 0.0
        %1428 = vmatpush.msra.mxu0 0.0
        %1429 = vmatpush.msra.mxu0 0.0
        %1430 = vmatpush.msra.mxu0 0.0
        %1431 = vmatpush.msra.mxu0 0.0
        %1432 = vmatpush.msra.mxu0 0.0
        %1433 = vmatpush.msra.mxu0 0.0
        %1434 = vmatpush.msra.mxu0 0.0
        %1435 = vmatpush.msra.mxu0 0.0
        %1436 = vmatpush.msra.mxu0 0.0
        %1437 = vmatpush.msra.mxu0 0.0
        %1438 = vmatpush.msra.mxu0 0.0
        %1439 = vmatpush.msra.mxu0 0.0
        %1440 = vmatpush.msra.mxu0 0.0
        %1441 = vmatpush.msra.mxu0 %v406
        %1442 = vmatpush.msra.mxu0 %v402
        %1443 = vmatmul.f32.gmra.mxu0 %v1416
        %v1444 = vpop.f32.mrf.mxu0
        %v1445 = vadd.f32 %v1317, %v1444
        %1446 = vmatmul.f32.gmra.mxu0 %v1419
        %v1447 = vpop.f32.mrf.mxu0
        %v1448 = vadd.f32 %v1320, %v1447
        %1449 = vmatmul.f32.gmra.mxu0 %v1422
        %v1450 = vpop.f32.mrf.mxu0
        %v1451 = vadd.f32 %v1323, %v1450
        %1452 = vmatmul.f32.gmra.mxu0 %v1425
        %v1453 = vpop.f32.mrf.mxu0
        %v1454 = vadd.f32 %v1326, %v1453
        %1455 = vdwg.mxu0
        %1456 = vmatpush.msra.mxu0 0.0
        %1457 = vmatpush.msra.mxu0 0.0
        %1458 = vmatpush.msra.mxu0 0.0
        %1459 = vmatpush.msra.mxu0 0.0
        %1460 = vmatpush.msra.mxu0 0.0
        %1461 = vmatpush.msra.mxu0 0.0
        %1462 = vmatpush.msra.mxu0 0.0
        %1463 = vmatpush.msra.mxu0 0.0
        %1464 = vmatpush.msra.mxu0 0.0
        %1465 = vmatpush.msra.mxu0 0.0
        %1466 = vmatpush.msra.mxu0 0.0
        %1467 = vmatpush.msra.mxu0 0.0
        %1468 = vmatpush.msra.mxu0 0.0
        %1469 = vmatpush.msra.mxu0 0.0
        %1470 = vmatpush.msra.mxu0 %v407
        %1471 = vmatpush.msra.mxu0 %v403
        %1472 = vmatmul.f32.gmra.mxu0 %v1416
        %v1473 = vpop.f32.mrf.mxu0
        %v1474 = vadd.f32 %v1346, %v1473
        %1475 = vmatmul.f32.gmra.mxu0 %v1419
        %v1476 = vpop.f32.mrf.mxu0
        %v1477 = vadd.f32 %v1349, %v1476
        %1478 = vmatmul.f32.gmra.mxu0 %v1422
        %v1479 = vpop.f32.mrf.mxu0
        %v1480 = vadd.f32 %v1352, %v1479
        %1481 = vmatmul.f32.gmra.mxu0 %v1425
        %v1482 = vpop.f32.mrf.mxu0
        %v1483 = vadd.f32 %v1355, %v1482
        %1484 = vdwg.mxu0
        %1485 = vmatpush.msra.mxu0 0.0
        %1486 = vmatpush.msra.mxu0 0.0
        %1487 = vmatpush.msra.mxu0 0.0
        %1488 = vmatpush.msra.mxu0 0.0
        %1489 = vmatpush.msra.mxu0 0.0
        %1490 = vmatpush.msra.mxu0 0.0
        %1491 = vmatpush.msra.mxu0 0.0
        %1492 = vmatpush.msra.mxu0 0.0
        %1493 = vmatpush.msra.mxu0 0.0
        %1494 = vmatpush.msra.mxu0 0.0
        %1495 = vmatpush.msra.mxu0 0.0
        %1496 = vmatpush.msra.mxu0 0.0
        %1497 = vmatpush.msra.mxu0 0.0
        %1498 = vmatpush.msra.mxu0 0.0
        %1499 = vmatpush.msra.mxu0 %v408
        %1500 = vmatpush.msra.mxu0 %v404
        %1501 = vmatmul.f32.gmra.mxu0 %v1416
        %v1502 = vpop.f32.mrf.mxu0
        %v1503 = vadd.f32 %v1375, %v1502
        %1504 = vmatmul.f32.gmra.mxu0 %v1419
        %v1505 = vpop.f32.mrf.mxu0
        %v1506 = vadd.f32 %v1378, %v1505
        %1507 = vmatmul.f32.gmra.mxu0 %v1422
        %v1508 = vpop.f32.mrf.mxu0
        %v1509 = vadd.f32 %v1381, %v1508
        %1510 = vmatmul.f32.gmra.mxu0 %v1425
        %v1511 = vpop.f32.mrf.mxu0
        %v1512 = vadd.f32 %v1384, %v1511
        %1513 = vdwg.mxu0
        %1514 = vmatpush.msra.mxu0 0.0
        %1515 = vmatpush.msra.mxu0 0.0
        %1516 = vmatpush.msra.mxu0 0.0
        %1517 = vmatpush.msra.mxu0 0.0
        %1518 = vmatpush.msra.mxu0 0.0
        %1519 = vmatpush.msra.mxu0 0.0
        %1520 = vmatpush.msra.mxu0 0.0
        %1521 = vmatpush.msra.mxu0 0.0
        %1522 = vmatpush.msra.mxu0 0.0
        %1523 = vmatpush.msra.mxu0 0.0
        %1524 = vmatpush.msra.mxu0 0.0
        %1525 = vmatpush.msra.mxu0 0.0
        %1526 = vmatpush.msra.mxu0 0.0
        %1527 = vmatpush.msra.mxu0 0.0
        %1528 = vmatpush.msra.mxu0 %v409
        %1529 = vmatpush.msra.mxu0 %v405
        %1530 = vmatmul.f32.gmra.mxu0 %v1416
        %v1531 = vpop.f32.mrf.mxu0
        %v1532 = vadd.f32 %v1404, %v1531
        %1533 = vmatmul.f32.gmra.mxu0 %v1419
        %v1534 = vpop.f32.mrf.mxu0
        %v1535 = vadd.f32 %v1407, %v1534
        %1536 = vmatmul.f32.gmra.mxu0 %v1422
        %v1537 = vpop.f32.mrf.mxu0
        %v1538 = vadd.f32 %v1410, %v1537
        %1539 = vmatmul.f32.gmra.mxu0 %v1425
        %v1540 = vpop.f32.mrf.mxu0
        %v1541 = vadd.f32 %v1413, %v1540
        %1542 = vdwg.mxu0
        %v1543 = vld [vmem:[%s9 + $0xa0] sm:$0xff]
        %v1544 = vld [vmem:[%s9 + $0xa8] sm:$0xff]
        %v1545 = vld [vmem:[%s9 + $0xb0] sm:$0xff]
        %v1546 = vld [vmem:[%s9 + $0xb8] sm:$0xff]
        %1548 = vset.pattern.permute.xlu0 0
        %1549 = vperm.xlu0 %1548, %v1543
        %v1550 = vpop.permute.xlu0 %1549
        %1553 = vset.pattern.permute.xlu0 0
        %1554 = vperm.xlu0 %1553, %v1544
        %v1555 = vpop.permute.xlu0 %1554
        %1558 = vset.pattern.permute.xlu0 0
        %1559 = vperm.xlu0 %1558, %v1545
        %v1560 = vpop.permute.xlu0 %1559
        %1563 = vset.pattern.permute.xlu0 0
        %1564 = vperm.xlu0 %1563, %v1546
        %v1565 = vpop.permute.xlu0 %1564
        %v1567 = vadd.f32 %v1445, %v1550
        %v1568 = vadd.f32 %v1474, %v1550
        %v1569 = vadd.f32 %v1503, %v1550
        %v1570 = vadd.f32 %v1532, %v1550
        %v1571 = vadd.f32 %v1448, %v1555
        %v1572 = vadd.f32 %v1477, %v1555
        %v1573 = vadd.f32 %v1506, %v1555
        %v1574 = vadd.f32 %v1535, %v1555
        %v1575 = vadd.f32 %v1451, %v1560
        %v1576 = vadd.f32 %v1480, %v1560
        %v1577 = vadd.f32 %v1509, %v1560
        %v1578 = vadd.f32 %v1538, %v1560
        %v1579 = vadd.f32 %v1454, %v1565
        %v1580 = vadd.f32 %v1483, %v1565
        %v1581 = vadd.f32 %v1512, %v1565
        %v1582 = vadd.f32 %v1541, %v1565
        %v1583 = vmax.f32 %v1567, 0.0
        %v1584 = vmax.f32 %v1568, 0.0
        %v1585 = vmax.f32 %v1569, 0.0
        %v1586 = vmax.f32 %v1570, 0.0
        %v1587 = vmax.f32 %v1571, 0.0
        %v1588 = vmax.f32 %v1572, 0.0
        %v1589 = vmax.f32 %v1573, 0.0
        %v1590 = vmax.f32 %v1574, 0.0
        %v1591 = vmax.f32 %v1575, 0.0
        %v1592 = vmax.f32 %v1576, 0.0
        %v1593 = vmax.f32 %v1577, 0.0
        %v1594 = vmax.f32 %v1578, 0.0
        %v1595 = vmax.f32 %v1579, 0.0
        %v1596 = vmax.f32 %v1580, 0.0
        %v1597 = vmax.f32 %v1581, 0.0
        %v1598 = vmax.f32 %v1582, 0.0
        %s1599 = scalar_lea.vmem %s2, 128
        %v1600 = vld [vmem:[%s1599] sm:$0xff]
        %v1601 = vld [vmem:[%s1599 + $0x8] sm:$0xff]
        %v1602 = vld [vmem:[%s1599 + $0x10] sm:$0xff]
        %v1603 = vld [vmem:[%s1599 + $0x18] sm:$0xff]
        %v1604 = vld [vmem:[%s9 + $0xc0] sm:$0xff]
        %v1605 = vld [vmem:[%s9 + $0xc8] sm:$0xff]
        %v1606 = vld [vmem:[%s9 + $0xd0] sm:$0xff]
        %v1607 = vld [vmem:[%s9 + $0xd8] sm:$0xff]
        %1609 = vset.pattern.permute.xlu0 0
        %1610 = vperm.xlu0 %1609, %v1604
        %v1611 = vpop.permute.xlu0 %1610
        %1614 = vset.pattern.permute.xlu0 0
        %1615 = vperm.xlu0 %1614, %v1605
        %v1616 = vpop.permute.xlu0 %1615
        %1619 = vset.pattern.permute.xlu0 0
        %1620 = vperm.xlu0 %1619, %v1606
        %v1621 = vpop.permute.xlu0 %1620
        %1624 = vset.pattern.permute.xlu0 0
        %1625 = vperm.xlu0 %1624, %v1607
        %v1626 = vpop.permute.xlu0 %1625
        %v1629 = vsel %vm615, %v1600, 0
        %v1632 = vsel %vm615, %v1601, 0
        %v1635 = vsel %vm615, %v1602, 0
        %v1638 = vsel %vm615, %v1603, 0
        %1640 = vmatpush.msra.mxu0 0.0
        %1641 = vmatpush.msra.mxu0 0.0
        %1642 = vmatpush.msra.mxu0 0.0
        %1643 = vmatpush.msra.mxu0 0.0
        %1644 = vmatpush.msra.mxu0 0.0
        %1645 = vmatpush.msra.mxu0 0.0
        %1646 = vmatpush.msra.mxu0 0.0
        %1647 = vmatpush.msra.mxu0 0.0
        %1648 = vmatpush.msra.mxu0 0.0
        %1649 = vmatpush.msra.mxu0 0.0
        %1650 = vmatpush.msra.mxu0 0.0
        %1651 = vmatpush.msra.mxu0 0.0
        %1652 = vmatpush.msra.mxu0 %v1595
        %1653 = vmatpush.msra.mxu0 %v1591
        %1654 = vmatpush.msra.mxu0 %v1587
        %1655 = vmatpush.msra.mxu0 %v1583
        %1656 = vmatmul.f32.gmra.mxu0 %v1629
        %v1657 = vpop.f32.mrf.mxu0
        %v1658 = vadd.f32 %v1611, %v1657
        %1659 = vmatmul.f32.gmra.mxu0 %v1632
        %v1660 = vpop.f32.mrf.mxu0
        %v1661 = vadd.f32 %v1616, %v1660
        %1662 = vmatmul.f32.gmra.mxu0 %v1635
        %v1663 = vpop.f32.mrf.mxu0
        %v1664 = vadd.f32 %v1621, %v1663
        %1665 = vmatmul.f32.gmra.mxu0 %v1638
        %v1666 = vpop.f32.mrf.mxu0
        %v1667 = vadd.f32 %v1626, %v1666
        %1668 = vdwg.mxu0
        %1669 = vmatpush.msra.mxu0 0.0
        %1670 = vmatpush.msra.mxu0 0.0
        %1671 = vmatpush.msra.mxu0 0.0
        %1672 = vmatpush.msra.mxu0 0.0
        %1673 = vmatpush.msra.mxu0 0.0
        %1674 = vmatpush.msra.mxu0 0.0
        %1675 = vmatpush.msra.mxu0 0.0
        %1676 = vmatpush.msra.mxu0 0.0
        %1677 = vmatpush.msra.mxu0 0.0
        %1678 = vmatpush.msra.mxu0 0.0
        %1679 = vmatpush.msra.mxu0 0.0
        %1680 = vmatpush.msra.mxu0 0.0
        %1681 = vmatpush.msra.mxu0 %v1596
        %1682 = vmatpush.msra.mxu0 %v1592
        %1683 = vmatpush.msra.mxu0 %v1588
        %1684 = vmatpush.msra.mxu0 %v1584
        %1685 = vmatmul.f32.gmra.mxu0 %v1629
        %v1686 = vpop.f32.mrf.mxu0
        %v1687 = vadd.f32 %v1611, %v1686
        %1688 = vmatmul.f32.gmra.mxu0 %v1632
        %v1689 = vpop.f32.mrf.mxu0
        %v1690 = vadd.f32 %v1616, %v1689
        %1691 = vmatmul.f32.gmra.mxu0 %v1635
        %v1692 = vpop.f32.mrf.mxu0
        %v1693 = vadd.f32 %v1621, %v1692
        %1694 = vmatmul.f32.gmra.mxu0 %v1638
        %v1695 = vpop.f32.mrf.mxu0
        %v1696 = vadd.f32 %v1626, %v1695
        %1697 = vdwg.mxu0
        %1698 = vmatpush.msra.mxu0 0.0
        %1699 = vmatpush.msra.mxu0 0.0
        %1700 = vmatpush.msra.mxu0 0.0
        %1701 = vmatpush.msra.mxu0 0.0
        %1702 = vmatpush.msra.mxu0 0.0
        %1703 = vmatpush.msra.mxu0 0.0
        %1704 = vmatpush.msra.mxu0 0.0
        %1705 = vmatpush.msra.mxu0 0.0
        %1706 = vmatpush.msra.mxu0 0.0
        %1707 = vmatpush.msra.mxu0 0.0
        %1708 = vmatpush.msra.mxu0 0.0
        %1709 = vmatpush.msra.mxu0 0.0
        %1710 = vmatpush.msra.mxu0 %v1597
        %1711 = vmatpush.msra.mxu0 %v1593
        %1712 = vmatpush.msra.mxu0 %v1589
        %1713 = vmatpush.msra.mxu0 %v1585
        %1714 = vmatmul.f32.gmra.mxu0 %v1629
        %v1715 = vpop.f32.mrf.mxu0
        %v1716 = vadd.f32 %v1611, %v1715
        %1717 = vmatmul.f32.gmra.mxu0 %v1632
        %v1718 = vpop.f32.mrf.mxu0
        %v1719 = vadd.f32 %v1616, %v1718
        %1720 = vmatmul.f32.gmra.mxu0 %v1635
        %v1721 = vpop.f32.mrf.mxu0
        %v1722 = vadd.f32 %v1621, %v1721
        %1723 = vmatmul.f32.gmra.mxu0 %v1638
        %v1724 = vpop.f32.mrf.mxu0
        %v1725 = vadd.f32 %v1626, %v1724
        %1726 = vdwg.mxu0
        %1727 = vmatpush.msra.mxu0 0.0
        %1728 = vmatpush.msra.mxu0 0.0
        %1729 = vmatpush.msra.mxu0 0.0
        %1730 = vmatpush.msra.mxu0 0.0
        %1731 = vmatpush.msra.mxu0 0.0
        %1732 = vmatpush.msra.mxu0 0.0
        %1733 = vmatpush.msra.mxu0 0.0
        %1734 = vmatpush.msra.mxu0 0.0
        %1735 = vmatpush.msra.mxu0 0.0
        %1736 = vmatpush.msra.mxu0 0.0
        %1737 = vmatpush.msra.mxu0 0.0
        %1738 = vmatpush.msra.mxu0 0.0
        %1739 = vmatpush.msra.mxu0 %v1598
        %1740 = vmatpush.msra.mxu0 %v1594
        %1741 = vmatpush.msra.mxu0 %v1590
        %1742 = vmatpush.msra.mxu0 %v1586
        %1743 = vmatmul.f32.gmra.mxu0 %v1629
        %v1744 = vpop.f32.mrf.mxu0
        %v1745 = vadd.f32 %v1611, %v1744
        %1746 = vmatmul.f32.gmra.mxu0 %v1632
        %v1747 = vpop.f32.mrf.mxu0
        %v1748 = vadd.f32 %v1616, %v1747
        %1749 = vmatmul.f32.gmra.mxu0 %v1635
        %v1750 = vpop.f32.mrf.mxu0
        %v1751 = vadd.f32 %v1621, %v1750
        %1752 = vmatmul.f32.gmra.mxu0 %v1638
        %v1753 = vpop.f32.mrf.mxu0
        %v1754 = vadd.f32 %v1626, %v1753
        %1755 = vdwg.mxu0
        %v1756 = vmax.f32 %v1658, 0.0
        %v1757 = vmax.f32 %v1687, 0.0
        %v1758 = vmax.f32 %v1716, 0.0
        %v1759 = vmax.f32 %v1745, 0.0
        %v1760 = vmax.f32 %v1661, 0.0
        %v1761 = vmax.f32 %v1690, 0.0
        %v1762 = vmax.f32 %v1719, 0.0
        %v1763 = vmax.f32 %v1748, 0.0
        %v1764 = vmax.f32 %v1664, 0.0
        %v1765 = vmax.f32 %v1693, 0.0
        %v1766 = vmax.f32 %v1722, 0.0
        %v1767 = vmax.f32 %v1751, 0.0
        %v1768 = vmax.f32 %v1667, 0.0
        %v1769 = vmax.f32 %v1696, 0.0
        %v1770 = vmax.f32 %v1725, 0.0
        %v1771 = vmax.f32 %v1754, 0.0
        %s1772 = scalar_lea.vmem %s2, 160
        %v1773 = vld [vmem:[%s1772] sm:$0xff]
        %v1774 = vld [vmem:[%s1772 + $0x8] sm:$0xff]
        %v1775 = vld [vmem:[%s1772 + $0x10] sm:$0xff]
        %v1776 = vld [vmem:[%s1772 + $0x18] sm:$0xff]
        %v1777 = vld [vmem:[%s9 + $0xe0] sm:$0xff]
        %v1778 = vld [vmem:[%s9 + $0xe8] sm:$0xff]
        %v1779 = vld [vmem:[%s9 + $0xf0] sm:$0xff]
        %v1780 = vld [vmem:[%s9 + $0xf8] sm:$0xff]
        %1782 = vset.pattern.permute.xlu0 0
        %1783 = vperm.xlu0 %1782, %v1777
        %v1784 = vpop.permute.xlu0 %1783
        %1787 = vset.pattern.permute.xlu0 0
        %1788 = vperm.xlu0 %1787, %v1778
        %v1789 = vpop.permute.xlu0 %1788
        %1792 = vset.pattern.permute.xlu0 0
        %1793 = vperm.xlu0 %1792, %v1779
        %v1794 = vpop.permute.xlu0 %1793
        %1797 = vset.pattern.permute.xlu0 0
        %1798 = vperm.xlu0 %1797, %v1780
        %v1799 = vpop.permute.xlu0 %1798
        %v1802 = vsel %vm615, %v1773, 0
        %v1805 = vsel %vm615, %v1774, 0
        %v1808 = vsel %vm615, %v1775, 0
        %v1811 = vsel %vm615, %v1776, 0
        %1813 = vmatpush.msra.mxu0 0.0
        %1814 = vmatpush.msra.mxu0 0.0
        %1815 = vmatpush.msra.mxu0 0.0
        %1816 = vmatpush.msra.mxu0 0.0
        %1817 = vmatpush.msra.mxu0 0.0
        %1818 = vmatpush.msra.mxu0 0.0
        %1819 = vmatpush.msra.mxu0 0.0
        %1820 = vmatpush.msra.mxu0 0.0
        %1821 = vmatpush.msra.mxu0 0.0
        %1822 = vmatpush.msra.mxu0 0.0
        %1823 = vmatpush.msra.mxu0 0.0
        %1824 = vmatpush.msra.mxu0 0.0
        %1825 = vmatpush.msra.mxu0 %v1768
        %1826 = vmatpush.msra.mxu0 %v1764
        %1827 = vmatpush.msra.mxu0 %v1760
        %1828 = vmatpush.msra.mxu0 %v1756
        %1829 = vmatmul.f32.gmra.mxu0 %v1802
        %v1830 = vpop.f32.mrf.mxu0
        %v1831 = vadd.f32 %v1784, %v1830
        %1832 = vmatmul.f32.gmra.mxu0 %v1805
        %v1833 = vpop.f32.mrf.mxu0
        %v1834 = vadd.f32 %v1789, %v1833
        %1835 = vmatmul.f32.gmra.mxu0 %v1808
        %v1836 = vpop.f32.mrf.mxu0
        %v1837 = vadd.f32 %v1794, %v1836
        %1838 = vmatmul.f32.gmra.mxu0 %v1811
        %v1839 = vpop.f32.mrf.mxu0
        %v1840 = vadd.f32 %v1799, %v1839
        %1841 = vdwg.mxu0
        %1842 = vmatpush.msra.mxu0 0.0
        %1843 = vmatpush.msra.mxu0 0.0
        %1844 = vmatpush.msra.mxu0 0.0
        %1845 = vmatpush.msra.mxu0 0.0
        %1846 = vmatpush.msra.mxu0 0.0
        %1847 = vmatpush.msra.mxu0 0.0
        %1848 = vmatpush.msra.mxu0 0.0
        %1849 = vmatpush.msra.mxu0 0.0
        %1850 = vmatpush.msra.mxu0 0.0
        %1851 = vmatpush.msra.mxu0 0.0
        %1852 = vmatpush.msra.mxu0 0.0
        %1853 = vmatpush.msra.mxu0 0.0
        %1854 = vmatpush.msra.mxu0 %v1769
        %1855 = vmatpush.msra.mxu0 %v1765
        %1856 = vmatpush.msra.mxu0 %v1761
        %1857 = vmatpush.msra.mxu0 %v1757
        %1858 = vmatmul.f32.gmra.mxu0 %v1802
        %v1859 = vpop.f32.mrf.mxu0
        %v1860 = vadd.f32 %v1784, %v1859
        %1861 = vmatmul.f32.gmra.mxu0 %v1805
        %v1862 = vpop.f32.mrf.mxu0
        %v1863 = vadd.f32 %v1789, %v1862
        %1864 = vmatmul.f32.gmra.mxu0 %v1808
        %v1865 = vpop.f32.mrf.mxu0
        %v1866 = vadd.f32 %v1794, %v1865
        %1867 = vmatmul.f32.gmra.mxu0 %v1811
        %v1868 = vpop.f32.mrf.mxu0
        %v1869 = vadd.f32 %v1799, %v1868
        %1870 = vdwg.mxu0
        %1871 = vmatpush.msra.mxu0 0.0
        %1872 = vmatpush.msra.mxu0 0.0
        %1873 = vmatpush.msra.mxu0 0.0
        %1874 = vmatpush.msra.mxu0 0.0
        %1875 = vmatpush.msra.mxu0 0.0
        %1876 = vmatpush.msra.mxu0 0.0
        %1877 = vmatpush.msra.mxu0 0.0
        %1878 = vmatpush.msra.mxu0 0.0
        %1879 = vmatpush.msra.mxu0 0.0
        %1880 = vmatpush.msra.mxu0 0.0
        %1881 = vmatpush.msra.mxu0 0.0
        %1882 = vmatpush.msra.mxu0 0.0
        %1883 = vmatpush.msra.mxu0 %v1770
        %1884 = vmatpush.msra.mxu0 %v1766
        %1885 = vmatpush.msra.mxu0 %v1762
        %1886 = vmatpush.msra.mxu0 %v1758
        %1887 = vmatmul.f32.gmra.mxu0 %v1802
        %v1888 = vpop.f32.mrf.mxu0
        %v1889 = vadd.f32 %v1784, %v1888
        %1890 = vmatmul.f32.gmra.mxu0 %v1805
        %v1891 = vpop.f32.mrf.mxu0
        %v1892 = vadd.f32 %v1789, %v1891
        %1893 = vmatmul.f32.gmra.mxu0 %v1808
        %v1894 = vpop.f32.mrf.mxu0
        %v1895 = vadd.f32 %v1794, %v1894
        %1896 = vmatmul.f32.gmra.mxu0 %v1811
        %v1897 = vpop.f32.mrf.mxu0
        %v1898 = vadd.f32 %v1799, %v1897
        %1899 = vdwg.mxu0
        %1900 = vmatpush.msra.mxu0 0.0
        %1901 = vmatpush.msra.mxu0 0.0
        %1902 = vmatpush.msra.mxu0 0.0
        %1903 = vmatpush.msra.mxu0 0.0
        %1904 = vmatpush.msra.mxu0 0.0
        %1905 = vmatpush.msra.mxu0 0.0
        %1906 = vmatpush.msra.mxu0 0.0
        %1907 = vmatpush.msra.mxu0 0.0
        %1908 = vmatpush.msra.mxu0 0.0
        %1909 = vmatpush.msra.mxu0 0.0
        %1910 = vmatpush.msra.mxu0 0.0
        %1911 = vmatpush.msra.mxu0 0.0
        %1912 = vmatpush.msra.mxu0 %v1771
        %1913 = vmatpush.msra.mxu0 %v1767
        %1914 = vmatpush.msra.mxu0 %v1763
        %1915 = vmatpush.msra.mxu0 %v1759
        %1916 = vmatmul.f32.gmra.mxu0 %v1802
        %v1917 = vpop.f32.mrf.mxu0
        %v1918 = vadd.f32 %v1784, %v1917
        %1919 = vmatmul.f32.gmra.mxu0 %v1805
        %v1920 = vpop.f32.mrf.mxu0
        %v1921 = vadd.f32 %v1789, %v1920
        %1922 = vmatmul.f32.gmra.mxu0 %v1808
        %v1923 = vpop.f32.mrf.mxu0
        %v1924 = vadd.f32 %v1794, %v1923
        %1925 = vmatmul.f32.gmra.mxu0 %v1811
        %v1926 = vpop.f32.mrf.mxu0
        %v1927 = vadd.f32 %v1799, %v1926
        %1928 = vdwg.mxu0
        %v1929 = vmax.f32 %v1831, 0.0
        %v1930 = vmax.f32 %v1860, 0.0
        %v1931 = vmax.f32 %v1889, 0.0
        %v1932 = vmax.f32 %v1918, 0.0
        %v1933 = vmax.f32 %v1834, 0.0
        %v1934 = vmax.f32 %v1863, 0.0
        %v1935 = vmax.f32 %v1892, 0.0
        %v1936 = vmax.f32 %v1921, 0.0
        %v1937 = vmax.f32 %v1837, 0.0
        %v1938 = vmax.f32 %v1866, 0.0
        %v1939 = vmax.f32 %v1895, 0.0
        %v1940 = vmax.f32 %v1924, 0.0
        %v1941 = vmax.f32 %v1840, 0.0
        %v1942 = vmax.f32 %v1869, 0.0
        %v1943 = vmax.f32 %v1898, 0.0
        %v1944 = vmax.f32 %v1927, 0.0
        %v1945 = vld [vmem:[%s5] sm:$0xff]
        %v1946 = vld [vmem:[%s5 + $0x8] sm:$0xff]
        %v1947 = vld [vmem:[%s5 + $0x10] sm:$0xff]
        %v1948 = vld [vmem:[%s5 + $0x18] sm:$0xff]
        %v1949 = vld [vmem:[%s5 + $0x20] sm:$0x1]
        %v1951 = vsel %vm615, %v1945, 0
        %v1954 = vsel %vm615, %v1946, 0
        %v1957 = vsel %vm615, %v1947, 0
        %v1960 = vsel %vm615, %v1948, 0
        %v1963 = vsel %vm615, %v1949, 0
        %1965 = vmatpush.msra.mxu0 0.0
        %1966 = vmatpush.msra.mxu0 0.0
        %1967 = vmatpush.msra.mxu0 0.0
        %1968 = vmatpush.msra.mxu0 0.0
        %1969 = vmatpush.msra.mxu0 0.0
        %1970 = vmatpush.msra.mxu0 0.0
        %1971 = vmatpush.msra.mxu0 0.0
        %1972 = vmatpush.msra.mxu0 0.0
        %1973 = vmatpush.msra.mxu0 0.0
        %1974 = vmatpush.msra.mxu0 0.0
        %1975 = vmatpush.msra.mxu0 0.0
        %1976 = vmatpush.msra.mxu0 0.0
        %1977 = vmatpush.msra.mxu0 %v1941
        %1978 = vmatpush.msra.mxu0 %v1937
        %1979 = vmatpush.msra.mxu0 %v1933
        %1980 = vmatpush.msra.mxu0 %v1929
        %1981 = vmatmul.f32.gmra.mxu0 %v1951
        %v1982 = vpop.f32.mrf.mxu0
        %v1983 = vadd.f32 0.0, %v1982
        %1984 = vmatmul.f32.gmra.mxu0 %v1954
        %v1985 = vpop.f32.mrf.mxu0
        %v1986 = vadd.f32 0.0, %v1985
        %1987 = vmatmul.f32.gmra.mxu0 %v1957
        %v1988 = vpop.f32.mrf.mxu0
        %v1989 = vadd.f32 0.0, %v1988
        %1990 = vmatmul.f32.gmra.mxu0 %v1960
        %v1991 = vpop.f32.mrf.mxu0
        %v1992 = vadd.f32 0.0, %v1991
        %1993 = vmatmul.f32.gmra.mxu0 %v1963
        %v1994 = vpop.f32.mrf.mxu0
        %v1995 = vadd.f32 0.0, %v1994
        %1996 = vdwg.mxu0
        %1997 = vmatpush.msra.mxu0 0.0
        %1998 = vmatpush.msra.mxu0 0.0
        %1999 = vmatpush.msra.mxu0 0.0
        %2000 = vmatpush.msra.mxu0 0.0
        %2001 = vmatpush.msra.mxu0 0.0
        %2002 = vmatpush.msra.mxu0 0.0
        %2003 = vmatpush.msra.mxu0 0.0
        %2004 = vmatpush.msra.mxu0 0.0
        %2005 = vmatpush.msra.mxu0 0.0
        %2006 = vmatpush.msra.mxu0 0.0
        %2007 = vmatpush.msra.mxu0 0.0
        %2008 = vmatpush.msra.mxu0 0.0
        %2009 = vmatpush.msra.mxu0 %v1942
        %2010 = vmatpush.msra.mxu0 %v1938
        %2011 = vmatpush.msra.mxu0 %v1934
        %2012 = vmatpush.msra.mxu0 %v1930
        %2013 = vmatmul.f32.gmra.mxu0 %v1951
        %v2014 = vpop.f32.mrf.mxu0
        %v2015 = vadd.f32 0.0, %v2014
        %2016 = vmatmul.f32.gmra.mxu0 %v1954
        %v2017 = vpop.f32.mrf.mxu0
        %v2018 = vadd.f32 0.0, %v2017
        %2019 = vmatmul.f32.gmra.mxu0 %v1957
        %v2020 = vpop.f32.mrf.mxu0
        %v2021 = vadd.f32 0.0, %v2020
        %2022 = vmatmul.f32.gmra.mxu0 %v1960
        %v2023 = vpop.f32.mrf.mxu0
        %v2024 = vadd.f32 0.0, %v2023
        %2025 = vmatmul.f32.gmra.mxu0 %v1963
        %v2026 = vpop.f32.mrf.mxu0
        %v2027 = vadd.f32 0.0, %v2026
        %2028 = vdwg.mxu0
        %2029 = vmatpush.msra.mxu0 0.0
        %2030 = vmatpush.msra.mxu0 0.0
        %2031 = vmatpush.msra.mxu0 0.0
        %2032 = vmatpush.msra.mxu0 0.0
        %2033 = vmatpush.msra.mxu0 0.0
        %2034 = vmatpush.msra.mxu0 0.0
        %2035 = vmatpush.msra.mxu0 0.0
        %2036 = vmatpush.msra.mxu0 0.0
        %2037 = vmatpush.msra.mxu0 0.0
        %2038 = vmatpush.msra.mxu0 0.0
        %2039 = vmatpush.msra.mxu0 0.0
        %2040 = vmatpush.msra.mxu0 0.0
        %2041 = vmatpush.msra.mxu0 %v1943
        %2042 = vmatpush.msra.mxu0 %v1939
        %2043 = vmatpush.msra.mxu0 %v1935
        %2044 = vmatpush.msra.mxu0 %v1931
        %2045 = vmatmul.f32.gmra.mxu0 %v1951
        %v2046 = vpop.f32.mrf.mxu0
        %v2047 = vadd.f32 0.0, %v2046
        %2048 = vmatmul.f32.gmra.mxu0 %v1954
        %v2049 = vpop.f32.mrf.mxu0
        %v2050 = vadd.f32 0.0, %v2049
        %2051 = vmatmul.f32.gmra.mxu0 %v1957
        %v2052 = vpop.f32.mrf.mxu0
        %v2053 = vadd.f32 0.0, %v2052
        %2054 = vmatmul.f32.gmra.mxu0 %v1960
        %v2055 = vpop.f32.mrf.mxu0
        %v2056 = vadd.f32 0.0, %v2055
        %2057 = vmatmul.f32.gmra.mxu0 %v1963
        %v2058 = vpop.f32.mrf.mxu0
        %v2059 = vadd.f32 0.0, %v2058
        %2060 = vdwg.mxu0
        %2061 = vmatpush.msra.mxu0 0.0
        %2062 = vmatpush.msra.mxu0 0.0
        %2063 = vmatpush.msra.mxu0 0.0
        %2064 = vmatpush.msra.mxu0 0.0
        %2065 = vmatpush.msra.mxu0 0.0
        %2066 = vmatpush.msra.mxu0 0.0
        %2067 = vmatpush.msra.mxu0 0.0
        %2068 = vmatpush.msra.mxu0 0.0
        %2069 = vmatpush.msra.mxu0 0.0
        %2070 = vmatpush.msra.mxu0 0.0
        %2071 = vmatpush.msra.mxu0 0.0
        %2072 = vmatpush.msra.mxu0 0.0
        %2073 = vmatpush.msra.mxu0 %v1944
        %2074 = vmatpush.msra.mxu0 %v1940
        %2075 = vmatpush.msra.mxu0 %v1936
        %2076 = vmatpush.msra.mxu0 %v1932
        %2077 = vmatmul.f32.gmra.mxu0 %v1951
        %v2078 = vpop.f32.mrf.mxu0
        %v2079 = vadd.f32 0.0, %v2078
        %2080 = vmatmul.f32.gmra.mxu0 %v1954
        %v2081 = vpop.f32.mrf.mxu0
        %v2082 = vadd.f32 0.0, %v2081
        %2083 = vmatmul.f32.gmra.mxu0 %v1957
        %v2084 = vpop.f32.mrf.mxu0
        %v2085 = vadd.f32 0.0, %v2084
        %2086 = vmatmul.f32.gmra.mxu0 %v1960
        %v2087 = vpop.f32.mrf.mxu0
        %v2088 = vadd.f32 0.0, %v2087
        %2089 = vmatmul.f32.gmra.mxu0 %v1963
        %v2090 = vpop.f32.mrf.mxu0
        %v2091 = vadd.f32 0.0, %v2090
        %2092 = vdwg.mxu0
        %v2093 = vld [vmem:[%s9 + $0x100] sm:$0xff]
        %v2094 = vld [vmem:[%s9 + $0x108] sm:$0xff]
        %v2095 = vld [vmem:[%s9 + $0x110] sm:$0xff]
        %v2096 = vld [vmem:[%s9 + $0x118] sm:$0xff]
        %2098 = vset.pattern.permute.xlu0 0
        %2099 = vperm.xlu0 %2098, %v2093
        %v2100 = vpop.permute.xlu0 %2099
        %2103 = vset.pattern.permute.xlu0 0
        %2104 = vperm.xlu0 %2103, %v2094
        %v2105 = vpop.permute.xlu0 %2104
        %2108 = vset.pattern.permute.xlu0 0
        %2109 = vperm.xlu0 %2108, %v2095
        %v2110 = vpop.permute.xlu0 %2109
        %2113 = vset.pattern.permute.xlu0 0
        %2114 = vperm.xlu0 %2113, %v2096
        %v2115 = vpop.permute.xlu0 %2114
        %v2117 = vadd.f32 %v1983, %v2100
        %v2118 = vadd.f32 %v2015, %v2100
        %v2119 = vadd.f32 %v2047, %v2100
        %v2120 = vadd.f32 %v2079, %v2100
        %v2121 = vadd.f32 %v1986, %v2105
        %v2122 = vadd.f32 %v2018, %v2105
        %v2123 = vadd.f32 %v2050, %v2105
        %v2124 = vadd.f32 %v2082, %v2105
        %v2125 = vadd.f32 %v1989, %v2110
        %v2126 = vadd.f32 %v2021, %v2110
        %v2127 = vadd.f32 %v2053, %v2110
        %v2128 = vadd.f32 %v2085, %v2110
        %v2129 = vadd.f32 %v1992, %v2115
        %v2130 = vadd.f32 %v2024, %v2115
        %v2131 = vadd.f32 %v2056, %v2115
        %v2132 = vadd.f32 %v2088, %v2115
        %v2133 = vld [vmem:[%s9 + $0x120] sm:$0x1]
        %2135 = vset.pattern.permute.xlu0 0
        %2136 = vperm.xlu0 %2135, %v2133
        %v2137 = vpop.permute.xlu0 %2136
        %v2139 = vadd.f32 %v1995, %v2137
        %v2140 = vadd.f32 %v2027, %v2137
        %v2141 = vadd.f32 %v2059, %v2137
        %v2142 = vadd.f32 %v2091, %v2137
        %v2143 = vld [vmem:[%s6] sm:$0xff]
        %v2144 = vld [vmem:[%s6 + $0x8] sm:$0xff]
        %v2145 = vld [vmem:[%s7] sm:$0xff]
        %v2146 = vld [vmem:[%s7 + $0x8] sm:$0xff]
        %vm2147 = vcmask 64512
        %v2149 = vsel %vm2147, %v2145, 0
        %v2152 = vsel %vm2147, %v2146, 0
        %2154 = vmatpush.msra.mxu0 0.0
        %2155 = vmatpush.msra.mxu0 0.0
        %2156 = vmatpush.msra.mxu0 0.0
        %2157 = vmatpush.msra.mxu0 0.0
        %2158 = vmatpush.msra.mxu0 0.0
        %2159 = vmatpush.msra.mxu0 0.0
        %2160 = vmatpush.msra.mxu0 0.0
        %2161 = vmatpush.msra.mxu0 0.0
        %2162 = vmatpush.msra.mxu0 0.0
        %2163 = vmatpush.msra.mxu0 0.0
        %2164 = vmatpush.msra.mxu0 0.0
        %2165 = vmatpush.msra.mxu0 0.0
        %2166 = vmatpush.msra.mxu0 0.0
        %2167 = vmatpush.msra.mxu0 0.0
        %2168 = vmatpush.msra.mxu0 0.0
        %2169 = vmatpush.msra.mxu0 %v410
        %2170 = vmatmul.f32.gmra.mxu0 %v2149
        %v2171 = vpop.f32.mrf.mxu0
        %v2172 = vadd.f32 0.0, %v2171
        %2173 = vmatmul.f32.gmra.mxu0 %v2152
        %v2174 = vpop.f32.mrf.mxu0
        %v2175 = vadd.f32 0.0, %v2174
        %2176 = vdwg.mxu0
        %2177 = vmatpush.msra.mxu0 0.0
        %2178 = vmatpush.msra.mxu0 0.0
        %2179 = vmatpush.msra.mxu0 0.0
        %2180 = vmatpush.msra.mxu0 0.0
        %2181 = vmatpush.msra.mxu0 0.0
        %2182 = vmatpush.msra.mxu0 0.0
        %2183 = vmatpush.msra.mxu0 0.0
        %2184 = vmatpush.msra.mxu0 0.0
        %2185 = vmatpush.msra.mxu0 0.0
        %2186 = vmatpush.msra.mxu0 0.0
        %2187 = vmatpush.msra.mxu0 0.0
        %2188 = vmatpush.msra.mxu0 0.0
        %2189 = vmatpush.msra.mxu0 0.0
        %2190 = vmatpush.msra.mxu0 0.0
        %2191 = vmatpush.msra.mxu0 0.0
        %2192 = vmatpush.msra.mxu0 %v411
        %2193 = vmatmul.f32.gmra.mxu0 %v2149
        %v2194 = vpop.f32.mrf.mxu0
        %v2195 = vadd.f32 0.0, %v2194
        %2196 = vmatmul.f32.gmra.mxu0 %v2152
        %v2197 = vpop.f32.mrf.mxu0
        %v2198 = vadd.f32 0.0, %v2197
        %2199 = vdwg.mxu0
        %2200 = vmatpush.msra.mxu0 0.0
        %2201 = vmatpush.msra.mxu0 0.0
        %2202 = vmatpush.msra.mxu0 0.0
        %2203 = vmatpush.msra.mxu0 0.0
        %2204 = vmatpush.msra.mxu0 0.0
        %2205 = vmatpush.msra.mxu0 0.0
        %2206 = vmatpush.msra.mxu0 0.0
        %2207 = vmatpush.msra.mxu0 0.0
        %2208 = vmatpush.msra.mxu0 0.0
        %2209 = vmatpush.msra.mxu0 0.0
        %2210 = vmatpush.msra.mxu0 0.0
        %2211 = vmatpush.msra.mxu0 0.0
        %2212 = vmatpush.msra.mxu0 0.0
        %2213 = vmatpush.msra.mxu0 0.0
        %2214 = vmatpush.msra.mxu0 0.0
        %2215 = vmatpush.msra.mxu0 %v412
        %2216 = vmatmul.f32.gmra.mxu0 %v2149
        %v2217 = vpop.f32.mrf.mxu0
        %v2218 = vadd.f32 0.0, %v2217
        %2219 = vmatmul.f32.gmra.mxu0 %v2152
        %v2220 = vpop.f32.mrf.mxu0
        %v2221 = vadd.f32 0.0, %v2220
        %2222 = vdwg.mxu0
        %2223 = vmatpush.msra.mxu0 0.0
        %2224 = vmatpush.msra.mxu0 0.0
        %2225 = vmatpush.msra.mxu0 0.0
        %2226 = vmatpush.msra.mxu0 0.0
        %2227 = vmatpush.msra.mxu0 0.0
        %2228 = vmatpush.msra.mxu0 0.0
        %2229 = vmatpush.msra.mxu0 0.0
        %2230 = vmatpush.msra.mxu0 0.0
        %2231 = vmatpush.msra.mxu0 0.0
        %2232 = vmatpush.msra.mxu0 0.0
        %2233 = vmatpush.msra.mxu0 0.0
        %2234 = vmatpush.msra.mxu0 0.0
        %2235 = vmatpush.msra.mxu0 0.0
        %2236 = vmatpush.msra.mxu0 0.0
        %2237 = vmatpush.msra.mxu0 0.0
        %2238 = vmatpush.msra.mxu0 %v413
        %2239 = vmatmul.f32.gmra.mxu0 %v2149
        %v2240 = vpop.f32.mrf.mxu0
        %v2241 = vadd.f32 0.0, %v2240
        %2242 = vmatmul.f32.gmra.mxu0 %v2152
        %v2243 = vpop.f32.mrf.mxu0
        %v2244 = vadd.f32 0.0, %v2243
        %2245 = vdwg.mxu0
        %v2247 = vsel %vm615, %v2143, 0
        %v2250 = vsel %vm615, %v2144, 0
        %2252 = vmatpush.msra.mxu0 0.0
        %2253 = vmatpush.msra.mxu0 0.0
        %2254 = vmatpush.msra.mxu0 0.0
        %2255 = vmatpush.msra.mxu0 0.0
        %2256 = vmatpush.msra.mxu0 0.0
        %2257 = vmatpush.msra.mxu0 0.0
        %2258 = vmatpush.msra.mxu0 0.0
        %2259 = vmatpush.msra.mxu0 0.0
        %2260 = vmatpush.msra.mxu0 0.0
        %2261 = vmatpush.msra.mxu0 0.0
        %2262 = vmatpush.msra.mxu0 0.0
        %2263 = vmatpush.msra.mxu0 0.0
        %2264 = vmatpush.msra.mxu0 %v2129
        %2265 = vmatpush.msra.mxu0 %v2125
        %2266 = vmatpush.msra.mxu0 %v2121
        %2267 = vmatpush.msra.mxu0 %v2117
        %2268 = vmatmul.f32.gmra.mxu0 %v2247
        %v2269 = vpop.f32.mrf.mxu0
        %v2270 = vadd.f32 %v2172, %v2269
        %2271 = vmatmul.f32.gmra.mxu0 %v2250
        %v2272 = vpop.f32.mrf.mxu0
        %v2273 = vadd.f32 %v2175, %v2272
        %2274 = vdwg.mxu0
        %2275 = vmatpush.msra.mxu0 0.0
        %2276 = vmatpush.msra.mxu0 0.0
        %2277 = vmatpush.msra.mxu0 0.0
        %2278 = vmatpush.msra.mxu0 0.0
        %2279 = vmatpush.msra.mxu0 0.0
        %2280 = vmatpush.msra.mxu0 0.0
        %2281 = vmatpush.msra.mxu0 0.0
        %2282 = vmatpush.msra.mxu0 0.0
        %2283 = vmatpush.msra.mxu0 0.0
        %2284 = vmatpush.msra.mxu0 0.0
        %2285 = vmatpush.msra.mxu0 0.0
        %2286 = vmatpush.msra.mxu0 0.0
        %2287 = vmatpush.msra.mxu0 %v2130
        %2288 = vmatpush.msra.mxu0 %v2126
        %2289 = vmatpush.msra.mxu0 %v2122
        %2290 = vmatpush.msra.mxu0 %v2118
        %2291 = vmatmul.f32.gmra.mxu0 %v2247
        %v2292 = vpop.f32.mrf.mxu0
        %v2293 = vadd.f32 %v2195, %v2292
        %2294 = vmatmul.f32.gmra.mxu0 %v2250
        %v2295 = vpop.f32.mrf.mxu0
        %v2296 = vadd.f32 %v2198, %v2295
        %2297 = vdwg.mxu0
        %2298 = vmatpush.msra.mxu0 0.0
        %2299 = vmatpush.msra.mxu0 0.0
        %2300 = vmatpush.msra.mxu0 0.0
        %2301 = vmatpush.msra.mxu0 0.0
        %2302 = vmatpush.msra.mxu0 0.0
        %2303 = vmatpush.msra.mxu0 0.0
        %2304 = vmatpush.msra.mxu0 0.0
        %2305 = vmatpush.msra.mxu0 0.0
        %2306 = vmatpush.msra.mxu0 0.0
        %2307 = vmatpush.msra.mxu0 0.0
        %2308 = vmatpush.msra.mxu0 0.0
        %2309 = vmatpush.msra.mxu0 0.0
        %2310 = vmatpush.msra.mxu0 %v2131
        %2311 = vmatpush.msra.mxu0 %v2127
        %2312 = vmatpush.msra.mxu0 %v2123
        %2313 = vmatpush.msra.mxu0 %v2119
        %2314 = vmatmul.f32.gmra.mxu0 %v2247
        %v2315 = vpop.f32.mrf.mxu0
        %v2316 = vadd.f32 %v2218, %v2315
        %2317 = vmatmul.f32.gmra.mxu0 %v2250
        %v2318 = vpop.f32.mrf.mxu0
        %v2319 = vadd.f32 %v2221, %v2318
        %2320 = vdwg.mxu0
        %2321 = vmatpush.msra.mxu0 0.0
        %2322 = vmatpush.msra.mxu0 0.0
        %2323 = vmatpush.msra.mxu0 0.0
        %2324 = vmatpush.msra.mxu0 0.0
        %2325 = vmatpush.msra.mxu0 0.0
        %2326 = vmatpush.msra.mxu0 0.0
        %2327 = vmatpush.msra.mxu0 0.0
        %2328 = vmatpush.msra.mxu0 0.0
        %2329 = vmatpush.msra.mxu0 0.0
        %2330 = vmatpush.msra.mxu0 0.0
        %2331 = vmatpush.msra.mxu0 0.0
        %2332 = vmatpush.msra.mxu0 0.0
        %2333 = vmatpush.msra.mxu0 %v2132
        %2334 = vmatpush.msra.mxu0 %v2128
        %2335 = vmatpush.msra.mxu0 %v2124
        %2336 = vmatpush.msra.mxu0 %v2120
        %2337 = vmatmul.f32.gmra.mxu0 %v2247
        %v2338 = vpop.f32.mrf.mxu0
        %v2339 = vadd.f32 %v2241, %v2338
        %2340 = vmatmul.f32.gmra.mxu0 %v2250
        %v2341 = vpop.f32.mrf.mxu0
        %v2342 = vadd.f32 %v2244, %v2341
        %2343 = vdwg.mxu0
        %v2344 = vld [vmem:[%s9 + $0x128] sm:$0xff]
        %v2345 = vld [vmem:[%s9 + $0x130] sm:$0xff]
        %2347 = vset.pattern.permute.xlu0 0
        %2348 = vperm.xlu0 %2347, %v2344
        %v2349 = vpop.permute.xlu0 %2348
        %2352 = vset.pattern.permute.xlu0 0
        %2353 = vperm.xlu0 %2352, %v2345
        %v2354 = vpop.permute.xlu0 %2353
        %v2356 = vadd.f32 %v2270, %v2349
        %v2357 = vadd.f32 %v2293, %v2349
        %v2358 = vadd.f32 %v2316, %v2349
        %v2359 = vadd.f32 %v2339, %v2349
        %v2360 = vadd.f32 %v2273, %v2354
        %v2361 = vadd.f32 %v2296, %v2354
        %v2362 = vadd.f32 %v2319, %v2354
        %v2363 = vadd.f32 %v2342, %v2354
        %v2364 = vmax.f32 %v2356, 0.0
        %v2365 = vmax.f32 %v2357, 0.0
        %v2366 = vmax.f32 %v2358, 0.0
        %v2367 = vmax.f32 %v2359, 0.0
        %v2368 = vmax.f32 %v2360, 0.0
        %v2369 = vmax.f32 %v2361, 0.0
        %v2370 = vmax.f32 %v2362, 0.0
        %v2371 = vmax.f32 %v2363, 0.0
        %v2372 = vld [vmem:[%s8] sm:$0x7]
        %v2373 = vld [vmem:[%s9 + $0x138] sm:$0x7]
        %2375 = vset.pattern.permute.xlu0 0
        %2376 = vperm.xlu0 %2375, %v2373
        %v2377 = vpop.permute.xlu0 %2376
        %v2380 = vsel %vm442, %v2372, 0
        %2382 = vmatpush.msra.mxu0 0.0
        %2383 = vmatpush.msra.mxu0 0.0
        %2384 = vmatpush.msra.mxu0 0.0
        %2385 = vmatpush.msra.mxu0 0.0
        %2386 = vmatpush.msra.mxu0 0.0
        %2387 = vmatpush.msra.mxu0 0.0
        %2388 = vmatpush.msra.mxu0 0.0
        %2389 = vmatpush.msra.mxu0 0.0
        %2390 = vmatpush.msra.mxu0 0.0
        %2391 = vmatpush.msra.mxu0 0.0
        %2392 = vmatpush.msra.mxu0 0.0
        %2393 = vmatpush.msra.mxu0 0.0
        %2394 = vmatpush.msra.mxu0 0.0
        %2395 = vmatpush.msra.mxu0 0.0
        %2396 = vmatpush.msra.mxu0 %v2368
        %2397 = vmatpush.msra.mxu0 %v2364
        %2398 = vmatmul.f32.gmra.mxu0 %v2380
        %v2399 = vpop.f32.mrf.mxu0
        %v2400 = vadd.f32 %v2377, %v2399
        %2401 = vdwg.mxu0
        %2402 = vmatpush.msra.mxu0 0.0
        %2403 = vmatpush.msra.mxu0 0.0
        %2404 = vmatpush.msra.mxu0 0.0
        %2405 = vmatpush.msra.mxu0 0.0
        %2406 = vmatpush.msra.mxu0 0.0
        %2407 = vmatpush.msra.mxu0 0.0
        %2408 = vmatpush.msra.mxu0 0.0
        %2409 = vmatpush.msra.mxu0 0.0
        %2410 = vmatpush.msra.mxu0 0.0
        %2411 = vmatpush.msra.mxu0 0.0
        %2412 = vmatpush.msra.mxu0 0.0
        %2413 = vmatpush.msra.mxu0 0.0
        %2414 = vmatpush.msra.mxu0 0.0
        %2415 = vmatpush.msra.mxu0 0.0
        %2416 = vmatpush.msra.mxu0 %v2369
        %2417 = vmatpush.msra.mxu0 %v2365
        %2418 = vmatmul.f32.gmra.mxu0 %v2380
        %v2419 = vpop.f32.mrf.mxu0
        %v2420 = vadd.f32 %v2377, %v2419
        %2421 = vdwg.mxu0
        %2422 = vmatpush.msra.mxu0 0.0
        %2423 = vmatpush.msra.mxu0 0.0
        %2424 = vmatpush.msra.mxu0 0.0
        %2425 = vmatpush.msra.mxu0 0.0
        %2426 = vmatpush.msra.mxu0 0.0
        %2427 = vmatpush.msra.mxu0 0.0
        %2428 = vmatpush.msra.mxu0 0.0
        %2429 = vmatpush.msra.mxu0 0.0
        %2430 = vmatpush.msra.mxu0 0.0
        %2431 = vmatpush.msra.mxu0 0.0
        %2432 = vmatpush.msra.mxu0 0.0
        %2433 = vmatpush.msra.mxu0 0.0
        %2434 = vmatpush.msra.mxu0 0.0
        %2435 = vmatpush.msra.mxu0 0.0
        %2436 = vmatpush.msra.mxu0 %v2370
        %2437 = vmatpush.msra.mxu0 %v2366
        %2438 = vmatmul.f32.gmra.mxu0 %v2380
        %v2439 = vpop.f32.mrf.mxu0
        %v2440 = vadd.f32 %v2377, %v2439
        %2441 = vdwg.mxu0
        %2442 = vmatpush.msra.mxu0 0.0
        %2443 = vmatpush.msra.mxu0 0.0
        %2444 = vmatpush.msra.mxu0 0.0
        %2445 = vmatpush.msra.mxu0 0.0
        %2446 = vmatpush.msra.mxu0 0.0
        %2447 = vmatpush.msra.mxu0 0.0
        %2448 = vmatpush.msra.mxu0 0.0
        %2449 = vmatpush.msra.mxu0 0.0
        %2450 = vmatpush.msra.mxu0 0.0
        %2451 = vmatpush.msra.mxu0 0.0
        %2452 = vmatpush.msra.mxu0 0.0
        %2453 = vmatpush.msra.mxu0 0.0
        %2454 = vmatpush.msra.mxu0 0.0
        %2455 = vmatpush.msra.mxu0 0.0
        %2456 = vmatpush.msra.mxu0 %v2371
        %2457 = vmatpush.msra.mxu0 %v2367
        %2458 = vmatmul.f32.gmra.mxu0 %v2380
        %v2459 = vpop.f32.mrf.mxu0
        %v2460 = vadd.f32 %v2377, %v2459
        %2461 = vdwg.mxu0
        %v2466 = vrot.slane %v2420, 4
        %v2467 = vrot.slane %v2460, 4
        %vm2468 = vcmask 1043456
        %v2469 = vsel %vm2468, %v2400, %v2466
        %v2470 = vsel %vm2468, %v2440, %v2467
        %2473 = vst [vmem:[%s399] sm:$0x77] %v2469
        %2474 = vst [vmem:[%s399 + $0x8] sm:$0x77] %v2470
        %v2479 = vrot.slane %v2140, 7
        %v2480 = vrot.slane %v2141, 6
        %v2481 = vrot.slane %v2142, 5
        %vm2482 = vcmask 1040384
        %v2483 = vsel %vm2482, %v2139, %v2479
        %vm2484 = vcmask 1042434
        %v2485 = vsel %vm2484, %v2480, %v2481
        %vm2486 = vcmask 1041408
        %v2487 = vsel %vm2486, %v2483, %v2485
        %v2489 = vlaneseq
        %vm2490 = vcmp.ge.s32.totalorder %v2489, 0
        %vm2491 = vcmp.lt.s32.totalorder %v2489, 512
        %vm2492 = vmand %vm2490, %vm2491
        %s2493 = scalar_lea.vmem %s399, 3 [#allocation3]
        %2494 = vst.msk [vmem:[%s2493] ss:$4 sm:$0xf] %vm2492, %v2487
        %s2495 = sand.u32 %s247, 1
        %s2496 = scalar_lea.sflag [#allocation4], %s2495
        %s2497 = sand.u32 %s247, 1
        %s2498 = smul.addr %s2497, 16
        %s2499 = scalar_lea.vmem [#allocation3], %s2498
        // Predicated region
        $region84: #{tpu_custom_call.1} parent=78 // pred_check
          %p2500 = pneg %p257
        $region85: #{tpu_custom_call.1} parent=78 // pred_check_branch
          %2502 = sbr.rel (%p2500) target = $region87
        $region86: #{tpu_custom_call.1} parent=78 // pred_region
          %s2503 = smul.u32 4, %s24
          %2505 = vsyncadd %s2496, 0
          %s2506 = smul.addr %s2503, 4
          %s2507 = scalar_lea.hbm %s10, %s2506
          %s2509 = sshll.u32 %s2499, 4
          %s2510 = int_to_ptr.vmem [resolvable:$true] %s2509
          %s2511 = sshll.u32 %s2507, 4
          %s2512 = int_to_ptr.hbm [resolvable:$true] %s2511
          %2514 = dma.vmem_to_hbm [thread:$0]  %s2510, 256, %s2512, %s2496
        $region87: #{tpu_custom_call.1} parent=78 // pred_fallthru
          _
      $region79: #{tpu_custom_call.1} parent=5 // pred_fallthru
        _
      %p2515 = scmp.le.s32.totalorder 2, %s19
      // Predicated region
      $region88: #{tpu_custom_call.1} parent=5 // pred_check
        %p2516 = pneg %p2515
      $region89: #{tpu_custom_call.1} parent=5 // pred_check_branch
        %2518 = sbr.rel (%p2516) target = $region91
      $region90: #{tpu_custom_call.1} parent=5 // pred_region
        %s2519 = ssub.s32 %s19, 2
        // Predicated region
        $region92: #{tpu_custom_call.1} parent=90 // pred_check
          %p2520 = pneg %p263
        $region93: #{tpu_custom_call.1} parent=90 // pred_check_branch
          %2522 = sbr.rel (%p2520) target = $region95
        $region94: #{tpu_custom_call.1} parent=90 // pred_region
          %s2523 = sand.u32 %s248, 1
          %s2524 = scalar_lea.sflag [#allocation4], %s2523
          %s2525 = sand.u32 %s248, 1
          %s2526 = smul.addr %s2525, 16
          %s2527 = scalar_lea.vmem [#allocation3], %s2526
          %2529 = dma.done %s2524, 256
        $region95: #{tpu_custom_call.1} parent=90 // pred_fallthru
          _
      $region91: #{tpu_custom_call.1} parent=5 // pred_fallthru
        _
    $region6: #{tpu_custom_call.1} parent=1 // loop_footer
      %s23 = sadd.s32 1, %s19
    $region7: #{tpu_custom_call.1} parent=1 // loop_footer_branch
      %18 = sbr.rel target = $region3
    $region8: #{tpu_custom_call.1} parent=1 // loop_exit
      _
    %2530 = vsyncpa [#allocation4], 1
    %s2531 = scalar_lea.sflag [#allocation4], 1
    %2532 = vsyncpa %s2531, 1

</llo_original>
